<compile_context>
chip_gen: v7x
topology: tpu7x:2x2x1
jax: 0.10.0
libtpu: 0.0.40
codegen_flags: <defaults>
</compile_context>

<pallas_src>
import math
from functools import partial

import jax
import jax.numpy as jnp
from jax.experimental import pallas as pl
from jax.experimental.pallas import tpu as pltpu


# ----------------------------------------------------------------------------
# Kernel
# ----------------------------------------------------------------------------
def _layer_norm(v, gamma, beta, eps=1e-5):
    mean = jnp.mean(v, axis=-1, keepdims=True)
    var = jnp.mean((v - mean) ** 2, axis=-1, keepdims=True)
    return (v - mean) * jax.lax.rsqrt(var + eps) * gamma + beta


def decoder_kernel(x_ref, mask_ref,
                   wq_ref, bq_ref, wk_ref, bk_ref, wv_ref, bv_ref,
                   wo_ref, bo_ref, g1_ref, be1_ref,
                   w1_ref, b1_ref, w2_ref, b2_ref, g2_ref, be2_ref,
                   o_ref, ctx_scratch, *, num_heads, d_k, d_v, bblk, seq_len):
    layer = pl.program_id(1)
    H, S = num_heads, seq_len

    # Seed the layer-resident carry with the input embeddings at layer 0.
    @pl.when(layer == 0)
    def _():
        o_ref[...] = x_ref[...]

    x = o_ref[...]                              # (Bblk, S, D) f32 carry
    D = x.shape[-1]
    x2d = x.reshape(bblk * S, D)                # slab for all matmuls
    x_bf = x2d.astype(jnp.bfloat16)

    wq = wq_ref[0]                              # bf16 (D, H*dk)
    wk = wk_ref[0]
    wv = wv_ref[0]                              # bf16 (D, H*dv)
    wo = wo_ref[0]                              # bf16 (H*dv, D)
    w1 = w1_ref[0]                              # bf16 (D, d_ff)
    w2 = w2_ref[0]                              # bf16 (d_ff, D)
    bq = bq_ref[0, 0]                           # f32 (H*dk,)
    bk = bk_ref[0, 0]
    bv = bv_ref[0, 0]
    bo = bo_ref[0, 0]                           # f32 (D,)
    b1 = b1_ref[0, 0]                           # f32 (d_ff,)
    b2 = b2_ref[0, 0]
    g1 = g1_ref[0, 0]
    be1 = be1_ref[0, 0]
    g2 = g2_ref[0, 0]
    be2 = be2_ref[0, 0]

    # ---- masked multi-head self-attention -----------------------------------
    # Wide slab projections on the MXU (bf16 operands, f32 accumulation).
    inv_sqrt_dk = 1.0 / math.sqrt(d_k)
    # Fold the 1/sqrt(dk) scale into Q once (one multiply over (Bblk*S, H*dk)).
    q = (jnp.dot(x_bf, wq, preferred_element_type=jnp.float32) + bq) * inv_sqrt_dk
    k = jnp.dot(x_bf, wk, preferred_element_type=jnp.float32) + bk
    v = jnp.dot(x_bf, wv, preferred_element_type=jnp.float32) + bv
    q_bf = q.astype(jnp.bfloat16)
    k_bf = k.astype(jnp.bfloat16)
    v_bf = v.astype(jnp.bfloat16)

    # Causal mask rebuilt in-kernel (cheap VALU filler; no (B,S,S) HBM input).
    row = jax.lax.broadcasted_iota(jnp.int32, (S, S), 0)
    col = jax.lax.broadcasted_iota(jnp.int32, (S, S), 1)
    causal = row >= col

    neg = jnp.float32(-1e9)
    zero = jnp.float32(0.0)

    # TODO(synk): flash-style KV-tiled online softmax for long sequences.
    for b in range(bblk):
        key_valid = mask_ref[b] > 0.5                                  # (1, S)
        bias = jnp.where(jnp.logical_and(causal, key_valid), zero, neg)  # (S,S)

        # Head-major relayout ONCE per slab element (no per-head lane slicing).
        qh = pltpu.einshape(
            "shd->hsd", q_bf[b * S:(b + 1) * S, :].reshape(S, H, d_k))
        kh = pltpu.einshape(
            "shd->hsd", k_bf[b * S:(b + 1) * S, :].reshape(S, H, d_k))
        vh = pltpu.einshape(
            "shd->hsd", v_bf[b * S:(b + 1) * S, :].reshape(S, H, d_v))

        s = jnp.einsum('hqd,hkd->hqk', qh, kh,
                       preferred_element_type=jnp.float32)             # (H,S,S)
        s = s + bias[None, :, :]
        s = s - jnp.max(s, axis=-1, keepdims=True)
        e = jnp.exp(s)
        p = e * pl.reciprocal(jnp.sum(e, axis=-1, keepdims=True), approx=True)
        ctx_h = jnp.einsum('hqk,hkd->hqd', p.astype(jnp.bfloat16), vh,
                           preferred_element_type=jnp.float32)         # (H,S,dv)
        ctx_scratch[b * S:(b + 1) * S, :] = pltpu.einshape(
            "hsd->shd", ctx_h.astype(jnp.bfloat16)).reshape(S, H * d_v)

    # One wide output projection over the whole slab (bf16 scratch operand).
    attn = jnp.dot(ctx_scratch[...], wo,
                   preferred_element_type=jnp.float32) + bo            # (N, D)

    # ---- AddNorm 1 (f32) -----------------------------------------------------
    y1 = _layer_norm(attn + x2d, g1, be1)

    # ---- FeedForward ---------------------------------------------------------
    hdn = jnp.maximum(
        jnp.dot(y1.astype(jnp.bfloat16), w1,
                preferred_element_type=jnp.float32) + b1, 0.0)
    ffn = jnp.dot(hdn.astype(jnp.bfloat16), w2,
                  preferred_element_type=jnp.float32) + b2

    # ---- AddNorm 2 (f32) -----------------------------------------------------
    o_ref[...] = _layer_norm(ffn + y1, g2, be2).reshape(
        bblk, S, D).astype(o_ref.dtype)


# ----------------------------------------------------------------------------
# Wrapper
# ----------------------------------------------------------------------------
def _pick_batch_block(B, cap=8):
    """Largest divisor of B that keeps >=2 parallel grid steps (capped)."""
    if B <= 1:
        return 1
    best = 1
    for cand in range(1, min(B, cap) + 1):
        if B % cand == 0 and B // cand >= 2:
            best = cand
    return best


def _cost_estimate(B, S, D, L, H, d_k, d_v, d_ff, bblk):
    qkv = 2 * B * S * D * (2 * H * d_k + H * d_v)
    attn = 2 * B * H * S * S * (d_k + d_v)
    oproj = 2 * B * S * (H * d_v) * D
    ffn = 2 * B * S * D * d_ff * 2
    flops = L * (qkv + attn + oproj + ffn)
    transcendentals = L * B * H * S * S                       # softmax exp
    wbytes_layer = 2 * (2 * D * H * d_k + D * H * d_v + H * d_v * D
                        + 2 * D * d_ff)                       # bf16 weights
    pbytes_layer = 4 * (2 * H * d_k + H * d_v + 6 * D + d_ff)  # f32 bias / LN
    n_blocks = max(1, B // bblk)
    bytes_accessed = (L * n_blocks * (wbytes_layer + pbytes_layer)
                      + 2 * B * S * D * 4 + B * S * 4)
    return pl.CostEstimate(flops=int(flops),
                           transcendentals=int(transcendentals),
                           bytes_accessed=int(bytes_accessed))


def decoder_forward(ctx_embeds, ctx_pad_mask, params, *, num_heads, d_k, d_v,
                    batch_block=None):
    """ctx_embeds: [B,S,D] f32; ctx_pad_mask: [B,S] f32 (1=valid, 0=pad)."""
    B, S, D = ctx_embeds.shape
    L = params['wq'].shape[0]
    d_ff = params['w1'].shape[-1]

    bblk = batch_block if batch_block is not None else _pick_batch_block(B)
    assert B % bblk == 0

    # Pad mask only (B,1,S); the causal+pad bias is rebuilt inside the kernel.
    pad_mask3 = ctx_pad_mask.astype(jnp.float32)[:, None, :]

    # Matmul weights in bf16 (bf16-native MXU, half the per-layer weight DMA);
    # biases / LayerNorm parameters stay f32.
    params = dict(params)
    for name in ('wq', 'wk', 'wv', 'wo', 'w1', 'w2'):
        params[name] = params[name].astype(jnp.bfloat16)

    def per_layer_spec(arr):
        _, a, b = arr.shape
        return pl.BlockSpec((1, a, b), lambda bb, l: (l, 0, 0))

    param_order = ['wq', 'bq', 'wk', 'bk', 'wv', 'bv', 'wo', 'bo',
                   'g1', 'be1', 'w1', 'b1', 'w2', 'b2', 'g2', 'be2']
    param_args = [params[n] for n in param_order]

    in_specs = [
        pl.BlockSpec((bblk, S, D), lambda bb, l: (bb, 0, 0)),   # ctx_embeds
        pl.BlockSpec((bblk, 1, S), lambda bb, l: (bb, 0, 0)),   # pad mask
    ] + [per_layer_spec(p) for p in param_args]

    out_specs = pl.BlockSpec((bblk, S, D), lambda bb, l: (bb, 0, 0))

    # Per-generation VMEM budget (v7x: 64 MiB/TC -> ~54 MiB; v5e/v6e: ~100 MiB).
    try:
        vmem_cap = pltpu.get_tpu_info().vmem_capacity_bytes
    except Exception:
        vmem_cap = 64 * 1024 * 1024
    vmem_limit = max(32 * 1024 * 1024,
                     min(100 * 1024 * 1024, int(vmem_cap * 0.85)))

    kernel = partial(decoder_kernel, num_heads=num_heads, d_k=d_k, d_v=d_v,
                     bblk=bblk, seq_len=S)

    return pl.pallas_call(
        kernel,
        out_shape=jax.ShapeDtypeStruct((B, S, D), jnp.float32),
        grid=(B // bblk, L),
        in_specs=in_specs,
        out_specs=out_specs,
        scratch_shapes=[pltpu.VMEM((bblk * S, num_heads * d_v), jnp.bfloat16)],
        compiler_params=pltpu.CompilerParams(
            dimension_semantics=("parallel", "arbitrary"),
            vmem_limit_bytes=vmem_limit),
        cost_estimate=_cost_estimate(B, S, D, L, num_heads, d_k, d_v, d_ff,
                                     bblk),
    )(ctx_embeds, pad_mask3, *param_args)


# ----------------------------------------------------------------------------
# Deterministic parameter init + pure-JAX reference (same bf16 matmul policy)
# ----------------------------------------------------------------------------
def init_params(key, num_layers, num_heads, d_model, d_k, d_v, d_ff):
    ks = jax.random.split(key, 16)
    s = 0.05
    n = jax.random.normal
    return {
        'wq': s * n(ks[0], (num_layers, d_model, num_heads * d_k), jnp.float32),
        'bq': s * n(ks[1], (num_layers, 1, num_heads * d_k), jnp.float32),
        'wk': s * n(ks[2], (num_layers, d_model, num_heads * d_k), jnp.float32),
        'bk': s * n(ks[3], (num_layers, 1, num_heads * d_k), jnp.float32),
        'wv': s * n(ks[4], (num_layers, d_model, num_heads * d_v), jnp.float32),
        'bv': s * n(ks[5], (num_layers, 1, num_heads * d_v), jnp.float32),
        'wo': s * n(ks[6], (num_layers, num_heads * d_v, d_model), jnp.float32),
        'bo': s * n(ks[7], (num_layers, 1, d_model), jnp.float32),
        'g1': 1.0 + s * n(ks[8], (num_layers, 1, d_model), jnp.float32),
        'be1': s * n(ks[9], (num_layers, 1, d_model), jnp.float32),
        'w1': s * n(ks[10], (num_layers, d_model, d_ff), jnp.float32),
        'b1': s * n(ks[11], (num_layers, 1, d_ff), jnp.float32),
        'w2': s * n(ks[12], (num_layers, d_ff, d_model), jnp.float32),
        'b2': s * n(ks[13], (num_layers, 1, d_model), jnp.float32),
        'g2': 1.0 + s * n(ks[14], (num_layers, 1, d_model), jnp.float32),
        'be2': s * n(ks[15], (num_layers, 1, d_model), jnp.float32),
    }


def decoder_reference(x, mask, params, *, num_heads, d_k, d_v):
    L = params['wq'].shape[0]
    B, S, D = x.shape
    bf = jnp.bfloat16
    inv_sqrt_dk = 1.0 / math.sqrt(d_k)

    q_idx = jnp.arange(S)[:, None]
    k_idx = jnp.arange(S)[None, :]
    causal = (q_idx >= k_idx)[None]
    key_valid = (mask > 0.5)[:, None, :]
    bias = jnp.where(jnp.logical_and(causal, key_valid),
                     0.0, -1e9).astype(jnp.float32)

    def ln(v, g, b, eps=1e-5):
        m = v.mean(-1, keepdims=True)
        var = ((v - m) ** 2).mean(-1, keepdims=True)
        return (v - m) * jax.lax.rsqrt(var + eps) * g + b

    out = x
    for l in range(L):
        wq = params['wq'][l].astype(bf); wk = params['wk'][l].astype(bf)
        wv = params['wv'][l].astype(bf); wo = params['wo'][l].astype(bf)
        w1 = params['w1'][l].astype(bf); w2 = params['w2'][l].astype(bf)
        xb = out.astype(bf)
        q = jnp.einsum('bsd,de->bse', xb, wq,
                       preferred_element_type=jnp.float32) + params['bq'][l, 0]
        k = jnp.einsum('bsd,de->bse', xb, wk,
                       preferred_element_type=jnp.float32) + params['bk'][l, 0]
        v = jnp.einsum('bsd,de->bse', xb, wv,
                       preferred_element_type=jnp.float32) + params['bv'][l, 0]
        qb, kb, vb = q.astype(bf), k.astype(bf), v.astype(bf)
        ctxs = []
        for h in range(num_heads):
            qh = qb[:, :, h * d_k:(h + 1) * d_k]
            kh = kb[:, :, h * d_k:(h + 1) * d_k]
            vh = vb[:, :, h * d_v:(h + 1) * d_v]
            s = jnp.einsum('bqd,bkd->bqk', qh, kh,
                           preferred_element_type=jnp.float32)
            s = s * inv_sqrt_dk + bias
            p = jax.nn.softmax(s, axis=-1)
            ctxs.append(jnp.einsum('bqk,bkd->bqd', p.astype(bf), vh,
                                   preferred_element_type=jnp.float32))
        ctx = jnp.concatenate(ctxs, axis=-1)
        attn = jnp.einsum('bse,ed->bsd', ctx.astype(bf), wo,
                          preferred_element_type=jnp.float32) + params['bo'][l, 0]
        y1 = ln(attn + out, params['g1'][l, 0], params['be1'][l, 0])
        h1 = jnp.maximum(
            jnp.einsum('bsd,df->bsf', y1.astype(bf), w1,
                       preferred_element_type=jnp.float32) + params['b1'][l, 0],
            0.0)
        ff = jnp.einsum('bsf,fd->bsd', h1.astype(bf), w2,
                        preferred_element_type=jnp.float32) + params['b2'][l, 0]
        out = ln(ff + y1, params['g2'][l, 0], params['be2'][l, 0])
    return out


# ----------------------------------------------------------------------------
if __name__ == "__main__":
    num_layers, num_heads = 2, 4
    d_model, d_k, d_v, d_ff = 32, 8, 8, 64
    B, S = 2, 8

    key = jax.random.PRNGKey(0)
    k_x, k_p = jax.random.split(key)

    ctx_embeds = jax.random.normal(k_x, (B, S, d_model), jnp.float32)
    # pad mask: 1.0 = valid token, 0.0 = padding (batch 1 has 2 padded tail pos)
    ctx_pad_mask = jnp.array(
        [[1, 1, 1, 1, 1, 1, 1, 1],
         [1, 1, 1, 1, 1, 1, 0, 0]], dtype=jnp.float32)

    params = init_params(k_p, num_layers, num_heads, d_model, d_k, d_v, d_ff)

    out = decoder_forward(ctx_embeds, ctx_pad_mask, params,
                          num_heads=num_heads, d_k=d_k, d_v=d_v)
    out = jax.block_until_ready(out)

    ref = decoder_reference(ctx_embeds, ctx_pad_mask, params,
                            num_heads=num_heads, d_k=d_k, d_v=d_v)
    assert out.shape == (B, S, d_model)
    err = float(jnp.max(jnp.abs(out - ref)))
    assert err < 5e-3, f"mismatch vs reference: max abs err {err}"

    print("KERNEL_OK")
</pallas_src>

<mosaic_0001>
module attributes {stable_mosaic.version = 11 : i64} {
  func.func @decoder_kernel(%arg0: i32, %arg1: i32, %arg2: memref<1x8x32xf32, #tpu.memory_space<vmem>>, %arg3: memref<1x1x8xf32, #tpu.memory_space<vmem>>, %arg4: memref<1x32x32xbf16, #tpu.memory_space<vmem>>, %arg5: memref<1x1x32xf32, #tpu.memory_space<vmem>>, %arg6: memref<1x32x32xbf16, #tpu.memory_space<vmem>>, %arg7: memref<1x1x32xf32, #tpu.memory_space<vmem>>, %arg8: memref<1x32x32xbf16, #tpu.memory_space<vmem>>, %arg9: memref<1x1x32xf32, #tpu.memory_space<vmem>>, %arg10: memref<1x32x32xbf16, #tpu.memory_space<vmem>>, %arg11: memref<1x1x32xf32, #tpu.memory_space<vmem>>, %arg12: memref<1x1x32xf32, #tpu.memory_space<vmem>>, %arg13: memref<1x1x32xf32, #tpu.memory_space<vmem>>, %arg14: memref<1x32x64xbf16, #tpu.memory_space<vmem>>, %arg15: memref<1x1x64xf32, #tpu.memory_space<vmem>>, %arg16: memref<1x64x32xbf16, #tpu.memory_space<vmem>>, %arg17: memref<1x1x32xf32, #tpu.memory_space<vmem>>, %arg18: memref<1x1x32xf32, #tpu.memory_space<vmem>>, %arg19: memref<1x1x32xf32, #tpu.memory_space<vmem>>, %arg20: memref<1x8x32xf32, #tpu.memory_space<vmem>>, %arg21: memref<8x32xbf16, #tpu.memory_space<vmem>>) attributes {dimension_semantics = [#tpu.dimension_semantics<parallel>, #tpu.dimension_semantics<arbitrary>], iteration_bounds = array<i64: 2, 2>, scalar_prefetch = 0 : i64, scratch_operands = 1 : i64, tpu.core_type = #tpu.core_type<tc>, window_params = [{transform_indices = @transform_0, window_bounds = array<i64: 1, 8, 32>}, {transform_indices = @transform_1, window_bounds = array<i64: 1, 1, 8>}, {transform_indices = @transform_2, window_bounds = array<i64: 1, 32, 32>}, {transform_indices = @transform_3, window_bounds = array<i64: 1, 1, 32>}, {transform_indices = @transform_4, window_bounds = array<i64: 1, 32, 32>}, {transform_indices = @transform_5, window_bounds = array<i64: 1, 1, 32>}, {transform_indices = @transform_6, window_bounds = array<i64: 1, 32, 32>}, {transform_indices = @transform_7, window_bounds = array<i64: 1, 1, 32>}, {transform_indices = @transform_8, window_bounds = array<i64: 1, 32, 32>}, {transform_indices = @transform_9, window_bounds = array<i64: 1, 1, 32>}, {transform_indices = @transform_10, window_bounds = array<i64: 1, 1, 32>}, {transform_indices = @transform_11, window_bounds = array<i64: 1, 1, 32>}, {transform_indices = @transform_12, window_bounds = array<i64: 1, 32, 64>}, {transform_indices = @transform_13, window_bounds = array<i64: 1, 1, 64>}, {transform_indices = @transform_14, window_bounds = array<i64: 1, 64, 32>}, {transform_indices = @transform_15, window_bounds = array<i64: 1, 1, 32>}, {transform_indices = @transform_16, window_bounds = array<i64: 1, 1, 32>}, {transform_indices = @transform_17, window_bounds = array<i64: 1, 1, 32>}, {transform_indices = @transform_18, window_bounds = array<i64: 1, 8, 32>}]} {
    %c0_i32 = arith.constant 0 : i32
    %0 = arith.cmpi eq, %arg1, %c0_i32 : i32
    %1 = arith.extui %0 : i1 to i32
    %c0_i32_0 = arith.constant 0 : i32
    %2 = arith.cmpi ne, %1, %c0_i32_0 : i32
    scf.if %2 {
      %c0_85 = arith.constant 0 : index
      %c0_86 = arith.constant 0 : index
      %c0_87 = arith.constant 0 : index
      %162 = vector.load %arg2[%c0_85, %c0_86, %c0_87] : memref<1x8x32xf32, #tpu.memory_space<vmem>>, vector<1x8x32xf32>
      %c0_88 = arith.constant 0 : index
      %c0_89 = arith.constant 0 : index
      %c0_90 = arith.constant 0 : index
      %163 = vector.load %arg20[%c0_88, %c0_89, %c0_90] : memref<1x8x32xf32, #tpu.memory_space<vmem>>, vector<1x8x32xf32>
      tpu.vector_store %arg20[%c0_88, %c0_89, %c0_90], %162 {strides = array<i32>} : memref<1x8x32xf32, #tpu.memory_space<vmem>>, vector<1x8x32xf32>,
    } else {
    }
    %c0 = arith.constant 0 : index
    %c0_1 = arith.constant 0 : index
    %c0_2 = arith.constant 0 : index
    %3 = vector.load %arg20[%c0, %c0_1, %c0_2] : memref<1x8x32xf32, #tpu.memory_space<vmem>>, vector<1x8x32xf32>
    %4 = vector.shape_cast %3 : vector<1x8x32xf32> to vector<8x32xf32>
    %5 = arith.truncf %4 : vector<8x32xf32> to vector<8x32xbf16>
    %c0_3 = arith.constant 0 : index
    %c0_4 = arith.constant 0 : index
    %c0_5 = arith.constant 0 : index
    %6 = vector.load %arg4[%c0_3, %c0_4, %c0_5] : memref<1x32x32xbf16, #tpu.memory_space<vmem>>, vector<1x32x32xbf16>
    %7 = vector.shape_cast %6 : vector<1x32x32xbf16> to vector<32x32xbf16>
    %c0_6 = arith.constant 0 : index
    %c0_7 = arith.constant 0 : index
    %c0_8 = arith.constant 0 : index
    %8 = vector.load %arg6[%c0_6, %c0_7, %c0_8] : memref<1x32x32xbf16, #tpu.memory_space<vmem>>, vector<1x32x32xbf16>
    %9 = vector.shape_cast %8 : vector<1x32x32xbf16> to vector<32x32xbf16>
    %c0_9 = arith.constant 0 : index
    %c0_10 = arith.constant 0 : index
    %c0_11 = arith.constant 0 : index
    %10 = vector.load %arg8[%c0_9, %c0_10, %c0_11] : memref<1x32x32xbf16, #tpu.memory_space<vmem>>, vector<1x32x32xbf16>
    %11 = vector.shape_cast %10 : vector<1x32x32xbf16> to vector<32x32xbf16>
    %c0_12 = arith.constant 0 : index
    %c0_13 = arith.constant 0 : index
    %c0_14 = arith.constant 0 : index
    %12 = vector.load %arg10[%c0_12, %c0_13, %c0_14] : memref<1x32x32xbf16, #tpu.memory_space<vmem>>, vector<1x32x32xbf16>
    %13 = vector.shape_cast %12 : vector<1x32x32xbf16> to vector<32x32xbf16>
    %c0_15 = arith.constant 0 : index
    %c0_16 = arith.constant 0 : index
    %c0_17 = arith.constant 0 : index
    %14 = vector.load %arg14[%c0_15, %c0_16, %c0_17] : memref<1x32x64xbf16, #tpu.memory_space<vmem>>, vector<1x32x64xbf16>
    %15 = vector.shape_cast %14 : vector<1x32x64xbf16> to vector<32x64xbf16>
    %c0_18 = arith.constant 0 : index
    %c0_19 = arith.constant 0 : index
    %c0_20 = arith.constant 0 : index
    %16 = vector.load %arg16[%c0_18, %c0_19, %c0_20] : memref<1x64x32xbf16, #tpu.memory_space<vmem>>, vector<1x64x32xbf16>
    %17 = vector.shape_cast %16 : vector<1x64x32xbf16> to vector<64x32xbf16>
    %c0_21 = arith.constant 0 : index
    %c0_22 = arith.constant 0 : index
    %c0_23 = arith.constant 0 : index
    %18 = vector.load %arg5[%c0_21, %c0_22, %c0_23] : memref<1x1x32xf32, #tpu.memory_space<vmem>>, vector<1x1x32xf32>
    %19 = vector.shape_cast %18 : vector<1x1x32xf32> to vector<32xf32>
    %c0_24 = arith.constant 0 : index
    %c0_25 = arith.constant 0 : index
    %c0_26 = arith.constant 0 : index
    %20 = vector.load %arg7[%c0_24, %c0_25, %c0_26] : memref<1x1x32xf32, #tpu.memory_space<vmem>>, vector<1x1x32xf32>
    %21 = vector.shape_cast %20 : vector<1x1x32xf32> to vector<32xf32>
    %c0_27 = arith.constant 0 : index
    %c0_28 = arith.constant 0 : index
    %c0_29 = arith.constant 0 : index
    %22 = vector.load %arg9[%c0_27, %c0_28, %c0_29] : memref<1x1x32xf32, #tpu.memory_space<vmem>>, vector<1x1x32xf32>
    %23 = vector.shape_cast %22 : vector<1x1x32xf32> to vector<32xf32>
    %c0_30 = arith.constant 0 : index
    %c0_31 = arith.constant 0 : index
    %c0_32 = arith.constant 0 : index
    %24 = vector.load %arg11[%c0_30, %c0_31, %c0_32] : memref<1x1x32xf32, #tpu.memory_space<vmem>>, vector<1x1x32xf32>
    %25 = vector.shape_cast %24 : vector<1x1x32xf32> to vector<32xf32>
    %c0_33 = arith.constant 0 : index
    %c0_34 = arith.constant 0 : index
    %c0_35 = arith.constant 0 : index
    %26 = vector.load %arg15[%c0_33, %c0_34, %c0_35] : memref<1x1x64xf32, #tpu.memory_space<vmem>>, vector<1x1x64xf32>
    %27 = vector.shape_cast %26 : vector<1x1x64xf32> to vector<64xf32>
    %c0_36 = arith.constant 0 : index
    %c0_37 = arith.constant 0 : index
    %c0_38 = arith.constant 0 : index
    %28 = vector.load %arg17[%c0_36, %c0_37, %c0_38] : memref<1x1x32xf32, #tpu.memory_space<vmem>>, vector<1x1x32xf32>
    %29 = vector.shape_cast %28 : vector<1x1x32xf32> to vector<32xf32>
    %c0_39 = arith.constant 0 : index
    %c0_40 = arith.constant 0 : index
    %c0_41 = arith.constant 0 : index
    %30 = vector.load %arg12[%c0_39, %c0_40, %c0_41] : memref<1x1x32xf32, #tpu.memory_space<vmem>>, vector<1x1x32xf32>
    %31 = vector.shape_cast %30 : vector<1x1x32xf32> to vector<32xf32>
    %c0_42 = arith.constant 0 : index
    %c0_43 = arith.constant 0 : index
    %c0_44 = arith.constant 0 : index
    %32 = vector.load %arg13[%c0_42, %c0_43, %c0_44] : memref<1x1x32xf32, #tpu.memory_space<vmem>>, vector<1x1x32xf32>
    %33 = vector.shape_cast %32 : vector<1x1x32xf32> to vector<32xf32>
    %c0_45 = arith.constant 0 : index
    %c0_46 = arith.constant 0 : index
    %c0_47 = arith.constant 0 : index
    %34 = vector.load %arg18[%c0_45, %c0_46, %c0_47] : memref<1x1x32xf32, #tpu.memory_space<vmem>>, vector<1x1x32xf32>
    %35 = vector.shape_cast %34 : vector<1x1x32xf32> to vector<32xf32>
    %c0_48 = arith.constant 0 : index
    %c0_49 = arith.constant 0 : index
    %c0_50 = arith.constant 0 : index
    %36 = vector.load %arg19[%c0_48, %c0_49, %c0_50] : memref<1x1x32xf32, #tpu.memory_space<vmem>>, vector<1x1x32xf32>
    %37 = vector.shape_cast %36 : vector<1x1x32xf32> to vector<32xf32>
    %cst = arith.constant dense<0.000000e+00> : vector<8x32xf32>
    %38 = tpu.matmul %5, %7, %cst {dimension_numbers = #tpu.dot_dimension_numbers<[1], [0], [0], [1], [0, 0, 1, 1], [], []>} : vector<8x32xbf16>, vector<32x32xbf16>, vector<8x32xf32> -> vector<8x32xf32>
    %39 = vector.shape_cast %19 : vector<32xf32> to vector<1x32xf32>
    %40 = vector.broadcast %39 : vector<1x32xf32> to vector<8x32xf32>
    %41 = arith.addf %38, %40 : vector<8x32xf32>
    %cst_51 = arith.constant 0.353553385 : f32
    %42 = vector.broadcast %cst_51 : f32 to vector<8x32xf32>
    %43 = arith.mulf %41, %42 : vector<8x32xf32>
    %cst_52 = arith.constant dense<0.000000e+00> : vector<8x32xf32>
    %44 = tpu.matmul %5, %9, %cst_52 {dimension_numbers = #tpu.dot_dimension_numbers<[1], [0], [0], [1], [0, 0, 1, 1], [], []>} : vector<8x32xbf16>, vector<32x32xbf16>, vector<8x32xf32> -> vector<8x32xf32>
    %45 = vector.shape_cast %21 : vector<32xf32> to vector<1x32xf32>
    %46 = vector.broadcast %45 : vector<1x32xf32> to vector<8x32xf32>
    %47 = arith.addf %44, %46 : vector<8x32xf32>
    %cst_53 = arith.constant dense<0.000000e+00> : vector<8x32xf32>
    %48 = tpu.matmul %5, %11, %cst_53 {dimension_numbers = #tpu.dot_dimension_numbers<[1], [0], [0], [1], [0, 0, 1, 1], [], []>} : vector<8x32xbf16>, vector<32x32xbf16>, vector<8x32xf32> -> vector<8x32xf32>
    %49 = vector.shape_cast %23 : vector<32xf32> to vector<1x32xf32>
    %50 = vector.broadcast %49 : vector<1x32xf32> to vector<8x32xf32>
    %51 = arith.addf %48, %50 : vector<8x32xf32>
    %52 = arith.truncf %43 : vector<8x32xf32> to vector<8x32xbf16>
    %53 = arith.truncf %47 : vector<8x32xf32> to vector<8x32xbf16>
    %54 = arith.truncf %51 : vector<8x32xf32> to vector<8x32xbf16>
    %55 = tpu.iota {dimensions = array<i32: 0>} : vector<8x8xi32>
    %56 = tpu.iota {dimensions = array<i32: 1>} : vector<8x8xi32>
    %57 = arith.cmpi sge, %55, %56 : vector<8x8xi32>
    %c0_54 = arith.constant 0 : index
    %c0_55 = arith.constant 0 : index
    %c0_56 = arith.constant 0 : index
    %58 = vector.load %arg3[%c0_54, %c0_55, %c0_56] : memref<1x1x8xf32, #tpu.memory_space<vmem>>, vector<1x1x8xf32>
    %59 = vector.shape_cast %58 : vector<1x1x8xf32> to vector<1x8xf32>
    %cst_57 = arith.constant 5.000000e-01 : f32
    %60 = vector.broadcast %cst_57 : f32 to vector<1x8xf32>
    %61 = arith.cmpf ogt, %59, %60 : vector<1x8xf32>
    %62 = vector.broadcast %61 : vector<1x8xi1> to vector<8x8xi1>
    %63 = arith.andi %57, %62 : vector<8x8xi1>
    %cst_58 = arith.constant 0.000000e+00 : f32
    %cst_59 = arith.constant -1.000000e+09 : f32
    %64 = vector.broadcast %cst_58 : f32 to vector<8x8xf32>
    %65 = vector.broadcast %cst_59 : f32 to vector<8x8xf32>
    %66 = arith.select %63, %64, %65 : vector<8x8xi1>, vector<8x8xf32>
    %67 = vector.shape_cast %52 : vector<8x32xbf16> to vector<8x4x8xbf16>
    %68 = tpu.transpose %67, [1, 0, 2] : vector<8x4x8xbf16> -> vector<4x8x8xbf16>
    %69 = vector.shape_cast %53 : vector<8x32xbf16> to vector<8x4x8xbf16>
    %70 = tpu.transpose %69, [1, 0, 2] : vector<8x4x8xbf16> -> vector<4x8x8xbf16>
    %71 = vector.shape_cast %54 : vector<8x32xbf16> to vector<8x4x8xbf16>
    %72 = tpu.transpose %71, [1, 0, 2] : vector<8x4x8xbf16> -> vector<4x8x8xbf16>
    "tpu.trace_start"() <{level = 10 : i32, message = "hqd,hkd->hqk"}> : () -> ()
    %cst_60 = arith.constant dense<0.000000e+00> : vector<4x8x8xf32>
    %73 = tpu.matmul %68, %70, %cst_60 {dimension_numbers = #tpu.dot_dimension_numbers<[2], [2], [1], [1], [0, 0, 0, 1, 1, 1], [0], [0]>} : vector<4x8x8xbf16>, vector<4x8x8xbf16>, vector<4x8x8xf32> -> vector<4x8x8xf32>
    "tpu.trace_stop"() : () -> ()
    %74 = vector.shape_cast %66 : vector<8x8xf32> to vector<1x8x8xf32>
    %75 = vector.broadcast %74 : vector<1x8x8xf32> to vector<4x8x8xf32>
    %76 = arith.addf %73, %75 : vector<4x8x8xf32>
    %cst_61 = arith.constant dense<0xFF800000> : vector<4x8xf32>
    %77 = vector.multi_reduction <maximumf>, %76, %cst_61 [2] : vector<4x8x8xf32> to vector<4x8xf32>
    %78 = vector.shape_cast %77 : vector<4x8xf32> to vector<4x8x1xf32>
    %79 = vector.broadcast %78 : vector<4x8x1xf32> to vector<4x8x8xf32>
    %80 = arith.subf %76, %79 : vector<4x8x8xf32>
    %81 = math.exp %80 : vector<4x8x8xf32>
    %cst_62 = arith.constant dense<0.000000e+00> : vector<4x8xf32>
    %82 = vector.multi_reduction <add>, %81, %cst_62 [2] : vector<4x8x8xf32> to vector<4x8xf32>
    %83 = vector.shape_cast %82 : vector<4x8xf32> to vector<4x8x1xf32>
    %84 = tpu.reciprocal %83 {approx = true} : vector<4x8x1xf32> -> vector<4x8x1xf32>
    %85 = vector.broadcast %84 : vector<4x8x1xf32> to vector<4x8x8xf32>
    %86 = arith.mulf %81, %85 : vector<4x8x8xf32>
    %87 = arith.truncf %86 : vector<4x8x8xf32> to vector<4x8x8xbf16>
    "tpu.trace_start"() <{level = 10 : i32, message = "hqk,hkd->hqd"}> : () -> ()
    %cst_63 = arith.constant dense<0.000000e+00> : vector<4x8x8xf32>
    %88 = tpu.matmul %87, %72, %cst_63 {dimension_numbers = #tpu.dot_dimension_numbers<[2], [1], [1], [2], [0, 0, 0, 1, 1, 2], [0], [0]>} : vector<4x8x8xbf16>, vector<4x8x8xbf16>, vector<4x8x8xf32> -> vector<4x8x8xf32>
    "tpu.trace_stop"() : () -> ()
    %89 = arith.truncf %88 : vector<4x8x8xf32> to vector<4x8x8xbf16>
    %90 = tpu.transpose %89, [1, 0, 2] : vector<4x8x8xbf16> -> vector<8x4x8xbf16>
    %91 = vector.shape_cast %90 : vector<8x4x8xbf16> to vector<8x32xbf16>
    %c0_64 = arith.constant 0 : index
    %c0_65 = arith.constant 0 : index
    %92 = vector.load %arg21[%c0_64, %c0_65] : memref<8x32xbf16, #tpu.memory_space<vmem>>, vector<8x32xbf16>
    tpu.vector_store %arg21[%c0_64, %c0_65], %91 {strides = array<i32>} : memref<8x32xbf16, #tpu.memory_space<vmem>>, vector<8x32xbf16>,
    %c0_66 = arith.constant 0 : index
    %c0_67 = arith.constant 0 : index
    %93 = vector.load %arg21[%c0_66, %c0_67] : memref<8x32xbf16, #tpu.memory_space<vmem>>, vector<8x32xbf16>
    %cst_68 = arith.constant dense<0.000000e+00> : vector<8x32xf32>
    %94 = tpu.matmul %93, %13, %cst_68 {dimension_numbers = #tpu.dot_dimension_numbers<[1], [0], [0], [1], [0, 0, 1, 1], [], []>} : vector<8x32xbf16>, vector<32x32xbf16>, vector<8x32xf32> -> vector<8x32xf32>
    %95 = vector.shape_cast %25 : vector<32xf32> to vector<1x32xf32>
    %96 = vector.broadcast %95 : vector<1x32xf32> to vector<8x32xf32>
    %97 = arith.addf %94, %96 : vector<8x32xf32>
    %98 = arith.addf %97, %4 : vector<8x32xf32>
    %cst_69 = arith.constant dense<0.000000e+00> : vector<8xf32>
    %99 = vector.multi_reduction <add>, %98, %cst_69 [1] : vector<8x32xf32> to vector<8xf32>
    %100 = vector.shape_cast %99 : vector<8xf32> to vector<8x1xf32>
    %cst_70 = arith.constant 3.200000e+01 : f32
    %101 = vector.broadcast %cst_70 : f32 to vector<8x1xf32>
    %102 = arith.divf %100, %101 : vector<8x1xf32>
    %103 = vector.broadcast %102 : vector<8x1xf32> to vector<8x32xf32>
    %104 = arith.subf %98, %103 : vector<8x32xf32>
    %105 = arith.mulf %104, %104 : vector<8x32xf32>
    %cst_71 = arith.constant dense<0.000000e+00> : vector<8xf32>
    %106 = vector.multi_reduction <add>, %105, %cst_71 [1] : vector<8x32xf32> to vector<8xf32>
    %107 = vector.shape_cast %106 : vector<8xf32> to vector<8x1xf32>
    %cst_72 = arith.constant 3.200000e+01 : f32
    %108 = vector.broadcast %cst_72 : f32 to vector<8x1xf32>
    %109 = arith.divf %107, %108 : vector<8x1xf32>
    %110 = vector.broadcast %102 : vector<8x1xf32> to vector<8x32xf32>
    %111 = arith.subf %98, %110 : vector<8x32xf32>
    %cst_73 = arith.constant 9.99999974E-6 : f32
    %112 = vector.broadcast %cst_73 : f32 to vector<8x1xf32>
    %113 = arith.addf %109, %112 : vector<8x1xf32>
    %114 = math.rsqrt %113 : vector<8x1xf32>
    %115 = vector.broadcast %114 : vector<8x1xf32> to vector<8x32xf32>
    %116 = arith.mulf %111, %115 : vector<8x32xf32>
    %117 = vector.shape_cast %31 : vector<32xf32> to vector<1x32xf32>
    %118 = vector.broadcast %117 : vector<1x32xf32> to vector<8x32xf32>
    %119 = arith.mulf %116, %118 : vector<8x32xf32>
    %120 = vector.shape_cast %33 : vector<32xf32> to vector<1x32xf32>
    %121 = vector.broadcast %120 : vector<1x32xf32> to vector<8x32xf32>
    %122 = arith.addf %119, %121 : vector<8x32xf32>
    %123 = arith.truncf %122 : vector<8x32xf32> to vector<8x32xbf16>
    %cst_74 = arith.constant dense<0.000000e+00> : vector<8x64xf32>
    %124 = tpu.matmul %123, %15, %cst_74 {dimension_numbers = #tpu.dot_dimension_numbers<[1], [0], [0], [1], [0, 0, 1, 1], [], []>} : vector<8x32xbf16>, vector<32x64xbf16>, vector<8x64xf32> -> vector<8x64xf32>
    %125 = vector.shape_cast %27 : vector<64xf32> to vector<1x64xf32>
    %126 = vector.broadcast %125 : vector<1x64xf32> to vector<8x64xf32>
    %127 = arith.addf %124, %126 : vector<8x64xf32>
    %cst_75 = arith.constant 0.000000e+00 : f32
    %128 = vector.broadcast %cst_75 : f32 to vector<8x64xf32>
    %129 = arith.maximumf %127, %128 : vector<8x64xf32>
    %130 = arith.truncf %129 : vector<8x64xf32> to vector<8x64xbf16>
    %cst_76 = arith.constant dense<0.000000e+00> : vector<8x32xf32>
    %131 = tpu.matmul %130, %17, %cst_76 {dimension_numbers = #tpu.dot_dimension_numbers<[1], [0], [0], [1], [0, 0, 1, 1], [], []>} : vector<8x64xbf16>, vector<64x32xbf16>, vector<8x32xf32> -> vector<8x32xf32>
    %132 = vector.shape_cast %29 : vector<32xf32> to vector<1x32xf32>
    %133 = vector.broadcast %132 : vector<1x32xf32> to vector<8x32xf32>
    %134 = arith.addf %131, %133 : vector<8x32xf32>
    %135 = arith.addf %134, %122 : vector<8x32xf32>
    %cst_77 = arith.constant dense<0.000000e+00> : vector<8xf32>
    %136 = vector.multi_reduction <add>, %135, %cst_77 [1] : vector<8x32xf32> to vector<8xf32>
    %137 = vector.shape_cast %136 : vector<8xf32> to vector<8x1xf32>
    %cst_78 = arith.constant 3.200000e+01 : f32
    %138 = vector.broadcast %cst_78 : f32 to vector<8x1xf32>
    %139 = arith.divf %137, %138 : vector<8x1xf32>
    %140 = vector.broadcast %139 : vector<8x1xf32> to vector<8x32xf32>
    %141 = arith.subf %135, %140 : vector<8x32xf32>
    %142 = arith.mulf %141, %141 : vector<8x32xf32>
    %cst_79 = arith.constant dense<0.000000e+00> : vector<8xf32>
    %143 = vector.multi_reduction <add>, %142, %cst_79 [1] : vector<8x32xf32> to vector<8xf32>
    %144 = vector.shape_cast %143 : vector<8xf32> to vector<8x1xf32>
    %cst_80 = arith.constant 3.200000e+01 : f32
    %145 = vector.broadcast %cst_80 : f32 to vector<8x1xf32>
    %146 = arith.divf %144, %145 : vector<8x1xf32>
    %147 = vector.broadcast %139 : vector<8x1xf32> to vector<8x32xf32>
    %148 = arith.subf %135, %147 : vector<8x32xf32>
    %cst_81 = arith.constant 9.99999974E-6 : f32
    %149 = vector.broadcast %cst_81 : f32 to vector<8x1xf32>
    %150 = arith.addf %146, %149 : vector<8x1xf32>
    %151 = math.rsqrt %150 : vector<8x1xf32>
    %152 = vector.broadcast %151 : vector<8x1xf32> to vector<8x32xf32>
    %153 = arith.mulf %148, %152 : vector<8x32xf32>
    %154 = vector.shape_cast %35 : vector<32xf32> to vector<1x32xf32>
    %155 = vector.broadcast %154 : vector<1x32xf32> to vector<8x32xf32>
    %156 = arith.mulf %153, %155 : vector<8x32xf32>
    %157 = vector.shape_cast %37 : vector<32xf32> to vector<1x32xf32>
    %158 = vector.broadcast %157 : vector<1x32xf32> to vector<8x32xf32>
    %159 = arith.addf %156, %158 : vector<8x32xf32>
    %160 = vector.shape_cast %159 : vector<8x32xf32> to vector<1x8x32xf32>
    %c0_82 = arith.constant 0 : index
    %c0_83 = arith.constant 0 : index
    %c0_84 = arith.constant 0 : index
    %161 = vector.load %arg20[%c0_82, %c0_83, %c0_84] : memref<1x8x32xf32, #tpu.memory_space<vmem>>, vector<1x8x32xf32>
    tpu.vector_store %arg20[%c0_82, %c0_83, %c0_84], %160 {strides = array<i32>} : memref<1x8x32xf32, #tpu.memory_space<vmem>>, vector<1x8x32xf32>,
    return
  }
  func.func @transform_0(%arg0: i32, %arg1: i32) -> (i32, i32, i32) {
    %c0_i32 = arith.constant 0 : i32
    %c0_i32_0 = arith.constant 0 : i32
    %c0_i32_1 = arith.constant 0 : i32
    return %arg0, %c0_i32, %c0_i32_0 : i32, i32, i32
  }
  func.func @transform_1(%arg0: i32, %arg1: i32) -> (i32, i32, i32) {
    %c0_i32 = arith.constant 0 : i32
    %c0_i32_0 = arith.constant 0 : i32
    %c0_i32_1 = arith.constant 0 : i32
    return %arg0, %c0_i32, %c0_i32_0 : i32, i32, i32
  }
  func.func @transform_2(%arg0: i32, %arg1: i32) -> (i32, i32, i32) {
    %c0_i32 = arith.constant 0 : i32
    %c0_i32_0 = arith.constant 0 : i32
    %c0_i32_1 = arith.constant 0 : i32
    return %arg1, %c0_i32, %c0_i32_0 : i32, i32, i32
  }
  func.func @transform_3(%arg0: i32, %arg1: i32) -> (i32, i32, i32) {
    %c0_i32 = arith.constant 0 : i32
    %c0_i32_0 = arith.constant 0 : i32
    %c0_i32_1 = arith.constant 0 : i32
    return %arg1, %c0_i32, %c0_i32_0 : i32, i32, i32
  }
  func.func @transform_4(%arg0: i32, %arg1: i32) -> (i32, i32, i32) {
    %c0_i32 = arith.constant 0 : i32
    %c0_i32_0 = arith.constant 0 : i32
    %c0_i32_1 = arith.constant 0 : i32
    return %arg1, %c0_i32, %c0_i32_0 : i32, i32, i32
  }
  func.func @transform_5(%arg0: i32, %arg1: i32) -> (i32, i32, i32) {
    %c0_i32 = arith.constant 0 : i32
    %c0_i32_0 = arith.constant 0 : i32
    %c0_i32_1 = arith.constant 0 : i32
    return %arg1, %c0_i32, %c0_i32_0 : i32, i32, i32
  }
  func.func @transform_6(%arg0: i32, %arg1: i32) -> (i32, i32, i32) {
    %c0_i32 = arith.constant 0 : i32
    %c0_i32_0 = arith.constant 0 : i32
    %c0_i32_1 = arith.constant 0 : i32
    return %arg1, %c0_i32, %c0_i32_0 : i32, i32, i32
  }
  func.func @transform_7(%arg0: i32, %arg1: i32) -> (i32, i32, i32) {
    %c0_i32 = arith.constant 0 : i32
    %c0_i32_0 = arith.constant 0 : i32
    %c0_i32_1 = arith.constant 0 : i32
    return %arg1, %c0_i32, %c0_i32_0 : i32, i32, i32
  }
  func.func @transform_8(%arg0: i32, %arg1: i32) -> (i32, i32, i32) {
    %c0_i32 = arith.constant 0 : i32
    %c0_i32_0 = arith.constant 0 : i32
    %c0_i32_1 = arith.constant 0 : i32
    return %arg1, %c0_i32, %c0_i32_0 : i32, i32, i32
  }
  func.func @transform_9(%arg0: i32, %arg1: i32) -> (i32, i32, i32) {
    %c0_i32 = arith.constant 0 : i32
    %c0_i32_0 = arith.constant 0 : i32
    %c0_i32_1 = arith.constant 0 : i32
    return %arg1, %c0_i32, %c0_i32_0 : i32, i32, i32
  }
  func.func @transform_10(%arg0: i32, %arg1: i32) -> (i32, i32, i32) {
    %c0_i32 = arith.constant 0 : i32
    %c0_i32_0 = arith.constant 0 : i32
    %c0_i32_1 = arith.constant 0 : i32
    return %arg1, %c0_i32, %c0_i32_0 : i32, i32, i32
  }
  func.func @transform_11(%arg0: i32, %arg1: i32) -> (i32, i32, i32) {
    %c0_i32 = arith.constant 0 : i32
    %c0_i32_0 = arith.constant 0 : i32
    %c0_i32_1 = arith.constant 0 : i32
    return %arg1, %c0_i32, %c0_i32_0 : i32, i32, i32
  }
  func.func @transform_12(%arg0: i32, %arg1: i32) -> (i32, i32, i32) {
    %c0_i32 = arith.constant 0 : i32
    %c0_i32_0 = arith.constant 0 : i32
    %c0_i32_1 = arith.constant 0 : i32
    return %arg1, %c0_i32, %c0_i32_0 : i32, i32, i32
  }
  func.func @transform_13(%arg0: i32, %arg1: i32) -> (i32, i32, i32) {
    %c0_i32 = arith.constant 0 : i32
    %c0_i32_0 = arith.constant 0 : i32
    %c0_i32_1 = arith.constant 0 : i32
    return %arg1, %c0_i32, %c0_i32_0 : i32, i32, i32
  }
  func.func @transform_14(%arg0: i32, %arg1: i32) -> (i32, i32, i32) {
    %c0_i32 = arith.constant 0 : i32
    %c0_i32_0 = arith.constant 0 : i32
    %c0_i32_1 = arith.constant 0 : i32
    return %arg1, %c0_i32, %c0_i32_0 : i32, i32, i32
  }
  func.func @transform_15(%arg0: i32, %arg1: i32) -> (i32, i32, i32) {
    %c0_i32 = arith.constant 0 : i32
    %c0_i32_0 = arith.constant 0 : i32
    %c0_i32_1 = arith.constant 0 : i32
    return %arg1, %c0_i32, %c0_i32_0 : i32, i32, i32
  }
  func.func @transform_16(%arg0: i32, %arg1: i32) -> (i32, i32, i32) {
    %c0_i32 = arith.constant 0 : i32
    %c0_i32_0 = arith.constant 0 : i32
    %c0_i32_1 = arith.constant 0 : i32
    return %arg1, %c0_i32, %c0_i32_0 : i32, i32, i32
  }
  func.func @transform_17(%arg0: i32, %arg1: i32) -> (i32, i32, i32) {
    %c0_i32 = arith.constant 0 : i32
    %c0_i32_0 = arith.constant 0 : i32
    %c0_i32_1 = arith.constant 0 : i32
    return %arg1, %c0_i32, %c0_i32_0 : i32, i32, i32
  }
  func.func @transform_18(%arg0: i32, %arg1: i32) -> (i32, i32, i32) {
    %c0_i32 = arith.constant 0 : i32
    %c0_i32_0 = arith.constant 0 : i32
    %c0_i32_1 = arith.constant 0 : i32
    return %arg0, %c0_i32, %c0_i32_0 : i32, i32, i32
  }
}

</mosaic_0001>

<llo_original>
// kernel: tpu_custom_call.1
$region0: #{tpu_custom_call.1}
  #allocation0 [shape = 'u32[]', space=smem, size = 0x4, offset = 0x4, fixed_abs, tag = 'smem constant byte address 0x4 - core index']
  #allocation1 [shape = 'u32[144,128]{1,0:T(1,128)}', space=vmem, size = 0x12000, scoped, tag = 'internal scratch']
  #allocation2 [shape = 'bf16[8,32]{1,0:T(8,128)(2,1)}', space=vmem, size = 0x800, scoped, tag = 'scratch operand']
  %s0 = inlined_call_operand.hbm [shape: f32[2,8,32], index: 0, kind: input, shape index: {}]
  %s1 = inlined_call_operand.vmem [shape: f32[2,1,8], index: 1, kind: input, shape index: {}]
  %s2 = inlined_call_operand.vmem [shape: bf16[2,32,32], index: 2, kind: input, shape index: {}]
  %s3 = inlined_call_operand.vmem [shape: f32[2,1,32], index: 3, kind: input, shape index: {}]
  %s4 = inlined_call_operand.vmem [shape: bf16[2,32,32], index: 4, kind: input, shape index: {}]
  %s5 = inlined_call_operand.vmem [shape: f32[2,1,32], index: 5, kind: input, shape index: {}]
  %s6 = inlined_call_operand.vmem [shape: bf16[2,32,32], index: 6, kind: input, shape index: {}]
  %s7 = inlined_call_operand.vmem [shape: f32[2,1,32], index: 7, kind: input, shape index: {}]
  %s8 = inlined_call_operand.hbm [shape: bf16[2,32,32], index: 8, kind: input, shape index: {}]
  %s9 = inlined_call_operand.vmem [shape: f32[2,1,32], index: 9, kind: input, shape index: {}]
  %s10 = inlined_call_operand.vmem [shape: f32[2,1,32], index: 10, kind: input, shape index: {}]
  %s11 = inlined_call_operand.vmem [shape: f32[2,1,32], index: 11, kind: input, shape index: {}]
  %s12 = inlined_call_operand.hbm [shape: bf16[2,32,64], index: 12, kind: input, shape index: {}]
  %s13 = inlined_call_operand.vmem [shape: f32[2,1,64], index: 13, kind: input, shape index: {}]
  %s14 = inlined_call_operand.vmem [shape: bf16[2,64,32], index: 14, kind: input, shape index: {}]
  %s15 = inlined_call_operand.vmem [shape: f32[2,1,32], index: 15, kind: input, shape index: {}]
  %s16 = inlined_call_operand.vmem [shape: f32[2,1,32], index: 16, kind: input, shape index: {}]
  %s17 = inlined_call_operand.vmem [shape: f32[2,1,32], index: 17, kind: input, shape index: {}]
  %s18 = inlined_call_operand.hbm [shape: f32[2,8,32], index: 18, kind: output, shape index: {}]
  %s19 = sld [smem:[#allocation0]]
  $region121: #{tpu_custom_call.1} parent=0
    _
  %s21 = ssub.s32 1, %s19
  %s22 = scalar_select 0, %s21, %s19
  $region1: #{tpu_custom_call.1} parent=0
    #allocation3 [shape = 'u8[8192]{0}', space=vmem, size = 0x2000, scoped, tag = 'input window, operand 0']
    #allocation4 [shape = 's32[2]{0}', space=sflag, size = 0x8, scoped, tag = 'scoped memory for tpu_custom_call.1']
    #allocation5 [shape = 's32[2]{0}', space=sflag, size = 0x8, scoped, tag = 'scoped memory for tpu_custom_call.1']
    #allocation6 [shape = 'u8[16384]{0}', space=vmem, size = 0x4000, scoped, tag = 'input window, operand 8']
    #allocation7 [shape = 's32[2]{0}', space=sflag, size = 0x8, scoped, tag = 'scoped memory for tpu_custom_call.1']
    #allocation8 [shape = 'u8[16384]{0}', space=vmem, size = 0x4000, scoped, tag = 'input window, operand 12']
    #allocation9 [shape = 'u8[8192]{0}', space=vmem, size = 0x2000, scoped, tag = 'output window, operand 0']
    %23 = vsyncpa [#allocation4], 0
    %s24 = scalar_lea.sflag [#allocation4], 1
    %25 = vsyncpa %s24, 0
    %26 = vsyncpa [#allocation7], 0
    %s27 = scalar_lea.sflag [#allocation7], 1
    %28 = vsyncpa %s27, 0
    %29 = vsyncpa [#allocation5], 0
    %s30 = scalar_lea.sflag [#allocation5], 1
    %31 = vsyncpa %s30, 0
    loop: start=0, step=1, limit=6
    $region2: #{tpu_custom_call.1} parent=1 // loop_pre_header
      _
    $region3: #{tpu_custom_call.1} parent=1 // loop_header
      %s33 = sphi 0, %s37
      %p34 = scmp.ge.s32.totalorder %s33, 6
      %s40 = sphi 0, %s52
      %s41 = sphi 0, %s48
      %s42 = sphi 0, %s40
      %s43 = sphi 0, %s41
      %s44 = sphi 0, %s42
      %s45 = sphi 0, %s43
      %s55 = sphi 0, %s57
      %s58 = sphi 0, %s55
      %s59 = sphi 0, %s58
      %s75 = sphi 0, %s59
      %s81 = sphi 0, %s83
      %s84 = sphi 0, %s81
      %s85 = sphi 0, %s84
      %s101 = sphi 0, %s85
      %s107 = sphi 0, %s109
      %s110 = sphi 0, %s107
      %s111 = sphi 0, %s110
      %s127 = sphi 0, %s111
      %s133 = sphi 0, %s135
      %s136 = sphi 0, %s133
      %s137 = sphi 0, %s136
      %s153 = sphi 0, %s137
      %s159 = sphi 0, %s161
      %s162 = sphi 0, %s159
      %s163 = sphi 0, %s162
      %s179 = sphi 0, %s163
      %s185 = sphi 0, %s187
      %s188 = sphi 0, %s185
      %s189 = sphi 0, %s188
      %s205 = sphi 0, %s189
      %s211 = sphi 0, %s213
      %s214 = sphi 0, %s211
      %s215 = sphi 0, %s214
      %s231 = sphi 0, %s215
      %s237 = sphi 0, %s239
      %s240 = sphi 0, %s237
      %s241 = sphi 0, %s240
      %s257 = sphi 0, %s241
      %s263 = sphi 0, %s265
      %s266 = sphi 0, %s263
      %s267 = sphi 0, %s266
      %s283 = sphi 0, %s267
      %s289 = sphi 0, %s291
      %s292 = sphi 0, %s289
      %s293 = sphi 0, %s292
      %s309 = sphi 0, %s293
      %s315 = sphi 0, %s317
      %s318 = sphi 0, %s315
      %s319 = sphi 0, %s318
      %s335 = sphi 0, %s319
      %s341 = sphi 0, %s343
      %s344 = sphi 0, %s341
      %s345 = sphi 0, %s344
      %s361 = sphi 0, %s345
      %s367 = sphi 0, %s369
      %s370 = sphi 0, %s367
      %s371 = sphi 0, %s370
      %s387 = sphi 0, %s371
      %s393 = sphi 0, %s395
      %s396 = sphi 0, %s393
      %s397 = sphi 0, %s396
      %s413 = sphi 0, %s397
      %s419 = sphi 0, %s421
      %s422 = sphi 0, %s419
      %s423 = sphi 0, %s422
      %s439 = sphi 0, %s423
      %s445 = sphi 0, %s447
      %s448 = sphi 0, %s445
      %s449 = sphi 0, %s448
      %s465 = sphi 0, %s449
      %s471 = sphi 0, %s473
      %s474 = sphi 0, %s471
      %s475 = sphi 0, %s474
      %s491 = sphi 0, %s475
      %s497 = sphi 0, %s499
      %s500 = sphi 0, %s497
      %s501 = sphi 0, %s500
      %s517 = sphi 0, %s501
      %s523 = sphi 0, %s525
      %s526 = sphi 0, %s523
      %s527 = sphi 0, %s526
      %s543 = sphi 0, %s527
    $region4: #{tpu_custom_call.1} parent=1 // loop_header_branch
      %36 = sbr.rel (%p34) target = $region8
    $region5: #{tpu_custom_call.1} parent=1 // loop_body
      %s38 = ssub.s32 %s33, 1
      %s39 = ssub.s32 %s33, 2
      %s46 = sadd.s32 1, %s41
      %p47 = scmp.ge.s32.totalorder %s46, 2
      %s48 = scalar_select %p47, 0, %s46
      %s49 = sadd.s32 1, %s40
      %s50 = scalar_select %p47, %s49, %s40
      %p51 = scmp.ge.s32.totalorder %s50, 2
      %s52 = scalar_select %p51, 0, %s50
      %s53 = ssub.s32 %s40, %s52
      %p54 = scmp.eq.s32.totalorder %s53, 0
      %s56 = sadd.s32 %s55, 1
      %s57 = scalar_select %p54, %s55, %s56
      %p60 = pneg %p54
      %p61 = scmp.eq.s32.totalorder %s33, 3
      %p62 = por %p60, %p61
      %p63 = scmp.ne.s32.totalorder %s55, %s58
      %p64 = scmp.eq.s32.totalorder %s33, 0
      %p65 = por %p63, %p64
      %p66 = scmp.ne.s32.totalorder %s55, %s58
      %p67 = scmp.eq.s32.totalorder %s38, 3
      %p68 = por %p66, %p67
      %p69 = scmp.ne.s32.totalorder %s58, %s59
      %p70 = scmp.eq.s32.totalorder %s38, 0
      %p71 = por %p69, %p70
      %p72 = scmp.ne.s32.totalorder %s58, %s59
      %p73 = scmp.eq.s32.totalorder %s39, 3
      %p74 = por %p72, %p73
      %p76 = scmp.ne.s32.totalorder %s59, %s75
      %p77 = scmp.eq.s32.totalorder %s39, 0
      %p78 = por %p76, %p77
      %s79 = ssub.s32 %s40, %s52
      %p80 = scmp.eq.s32.totalorder %s79, 0
      %s82 = sadd.s32 %s81, 1
      %s83 = scalar_select %p80, %s81, %s82
      %p86 = pneg %p80
      %p87 = scmp.eq.s32.totalorder %s33, 3
      %p88 = por %p86, %p87
      %p89 = scmp.ne.s32.totalorder %s81, %s84
      %p90 = scmp.eq.s32.totalorder %s33, 0
      %p91 = por %p89, %p90
      %p92 = scmp.ne.s32.totalorder %s81, %s84
      %p93 = scmp.eq.s32.totalorder %s38, 3
      %p94 = por %p92, %p93
      %p95 = scmp.ne.s32.totalorder %s84, %s85
      %p96 = scmp.eq.s32.totalorder %s38, 0
      %p97 = por %p95, %p96
      %p98 = scmp.ne.s32.totalorder %s84, %s85
      %p99 = scmp.eq.s32.totalorder %s39, 3
      %p100 = por %p98, %p99
      %p102 = scmp.ne.s32.totalorder %s85, %s101
      %p103 = scmp.eq.s32.totalorder %s39, 0
      %p104 = por %p102, %p103
      %s105 = ssub.s32 %s41, %s48
      %p106 = scmp.eq.s32.totalorder %s105, 0
      %s108 = sadd.s32 %s107, 1
      %s109 = scalar_select %p106, %s107, %s108
      %p112 = pneg %p106
      %p113 = scmp.eq.s32.totalorder %s33, 3
      %p114 = por %p112, %p113
      %p115 = scmp.ne.s32.totalorder %s107, %s110
      %p116 = scmp.eq.s32.totalorder %s33, 0
      %p117 = por %p115, %p116
      %p118 = scmp.ne.s32.totalorder %s107, %s110
      %p119 = scmp.eq.s32.totalorder %s38, 3
      %p120 = por %p118, %p119
      %p121 = scmp.ne.s32.totalorder %s110, %s111
      %p122 = scmp.eq.s32.totalorder %s38, 0
      %p123 = por %p121, %p122
      %p124 = scmp.ne.s32.totalorder %s110, %s111
      %p125 = scmp.eq.s32.totalorder %s39, 3
      %p126 = por %p124, %p125
      %p128 = scmp.ne.s32.totalorder %s111, %s127
      %p129 = scmp.eq.s32.totalorder %s39, 0
      %p130 = por %p128, %p129
      %s131 = ssub.s32 %s41, %s48
      %p132 = scmp.eq.s32.totalorder %s131, 0
      %s134 = sadd.s32 %s133, 1
      %s135 = scalar_select %p132, %s133, %s134
      %p138 = pneg %p132
      %p139 = scmp.eq.s32.totalorder %s33, 3
      %p140 = por %p138, %p139
      %p141 = scmp.ne.s32.totalorder %s133, %s136
      %p142 = scmp.eq.s32.totalorder %s33, 0
      %p143 = por %p141, %p142
      %p144 = scmp.ne.s32.totalorder %s133, %s136
      %p145 = scmp.eq.s32.totalorder %s38, 3
      %p146 = por %p144, %p145
      %p147 = scmp.ne.s32.totalorder %s136, %s137
      %p148 = scmp.eq.s32.totalorder %s38, 0
      %p149 = por %p147, %p148
      %p150 = scmp.ne.s32.totalorder %s136, %s137
      %p151 = scmp.eq.s32.totalorder %s39, 3
      %p152 = por %p150, %p151
      %p154 = scmp.ne.s32.totalorder %s137, %s153
      %p155 = scmp.eq.s32.totalorder %s39, 0
      %p156 = por %p154, %p155
      %s157 = ssub.s32 %s41, %s48
      %p158 = scmp.eq.s32.totalorder %s157, 0
      %s160 = sadd.s32 %s159, 1
      %s161 = scalar_select %p158, %s159, %s160
      %p164 = pneg %p158
      %p165 = scmp.eq.s32.totalorder %s33, 3
      %p166 = por %p164, %p165
      %p167 = scmp.ne.s32.totalorder %s159, %s162
      %p168 = scmp.eq.s32.totalorder %s33, 0
      %p169 = por %p167, %p168
      %p170 = scmp.ne.s32.totalorder %s159, %s162
      %p171 = scmp.eq.s32.totalorder %s38, 3
      %p172 = por %p170, %p171
      %p173 = scmp.ne.s32.totalorder %s162, %s163
      %p174 = scmp.eq.s32.totalorder %s38, 0
      %p175 = por %p173, %p174
      %p176 = scmp.ne.s32.totalorder %s162, %s163
      %p177 = scmp.eq.s32.totalorder %s39, 3
      %p178 = por %p176, %p177
      %p180 = scmp.ne.s32.totalorder %s163, %s179
      %p181 = scmp.eq.s32.totalorder %s39, 0
      %p182 = por %p180, %p181
      %s183 = ssub.s32 %s41, %s48
      %p184 = scmp.eq.s32.totalorder %s183, 0
      %s186 = sadd.s32 %s185, 1
      %s187 = scalar_select %p184, %s185, %s186
      %p190 = pneg %p184
      %p191 = scmp.eq.s32.totalorder %s33, 3
      %p192 = por %p190, %p191
      %p193 = scmp.ne.s32.totalorder %s185, %s188
      %p194 = scmp.eq.s32.totalorder %s33, 0
      %p195 = por %p193, %p194
      %p196 = scmp.ne.s32.totalorder %s185, %s188
      %p197 = scmp.eq.s32.totalorder %s38, 3
      %p198 = por %p196, %p197
      %p199 = scmp.ne.s32.totalorder %s188, %s189
      %p200 = scmp.eq.s32.totalorder %s38, 0
      %p201 = por %p199, %p200
      %p202 = scmp.ne.s32.totalorder %s188, %s189
      %p203 = scmp.eq.s32.totalorder %s39, 3
      %p204 = por %p202, %p203
      %p206 = scmp.ne.s32.totalorder %s189, %s205
      %p207 = scmp.eq.s32.totalorder %s39, 0
      %p208 = por %p206, %p207
      %s209 = ssub.s32 %s41, %s48
      %p210 = scmp.eq.s32.totalorder %s209, 0
      %s212 = sadd.s32 %s211, 1
      %s213 = scalar_select %p210, %s211, %s212
      %p216 = pneg %p210
      %p217 = scmp.eq.s32.totalorder %s33, 3
      %p218 = por %p216, %p217
      %p219 = scmp.ne.s32.totalorder %s211, %s214
      %p220 = scmp.eq.s32.totalorder %s33, 0
      %p221 = por %p219, %p220
      %p222 = scmp.ne.s32.totalorder %s211, %s214
      %p223 = scmp.eq.s32.totalorder %s38, 3
      %p224 = por %p222, %p223
      %p225 = scmp.ne.s32.totalorder %s214, %s215
      %p226 = scmp.eq.s32.totalorder %s38, 0
      %p227 = por %p225, %p226
      %p228 = scmp.ne.s32.totalorder %s214, %s215
      %p229 = scmp.eq.s32.totalorder %s39, 3
      %p230 = por %p228, %p229
      %p232 = scmp.ne.s32.totalorder %s215, %s231
      %p233 = scmp.eq.s32.totalorder %s39, 0
      %p234 = por %p232, %p233
      %s235 = ssub.s32 %s41, %s48
      %p236 = scmp.eq.s32.totalorder %s235, 0
      %s238 = sadd.s32 %s237, 1
      %s239 = scalar_select %p236, %s237, %s238
      %p242 = pneg %p236
      %p243 = scmp.eq.s32.totalorder %s33, 3
      %p244 = por %p242, %p243
      %p245 = scmp.ne.s32.totalorder %s237, %s240
      %p246 = scmp.eq.s32.totalorder %s33, 0
      %p247 = por %p245, %p246
      %p248 = scmp.ne.s32.totalorder %s237, %s240
      %p249 = scmp.eq.s32.totalorder %s38, 3
      %p250 = por %p248, %p249
      %p251 = scmp.ne.s32.totalorder %s240, %s241
      %p252 = scmp.eq.s32.totalorder %s38, 0
      %p253 = por %p251, %p252
      %p254 = scmp.ne.s32.totalorder %s240, %s241
      %p255 = scmp.eq.s32.totalorder %s39, 3
      %p256 = por %p254, %p255
      %p258 = scmp.ne.s32.totalorder %s241, %s257
      %p259 = scmp.eq.s32.totalorder %s39, 0
      %p260 = por %p258, %p259
      %s261 = ssub.s32 %s41, %s48
      %p262 = scmp.eq.s32.totalorder %s261, 0
      %s264 = sadd.s32 %s263, 1
      %s265 = scalar_select %p262, %s263, %s264
      %p268 = pneg %p262
      %p269 = scmp.eq.s32.totalorder %s33, 3
      %p270 = por %p268, %p269
      %p271 = scmp.ne.s32.totalorder %s263, %s266
      %p272 = scmp.eq.s32.totalorder %s33, 0
      %p273 = por %p271, %p272
      %p274 = scmp.ne.s32.totalorder %s263, %s266
      %p275 = scmp.eq.s32.totalorder %s38, 3
      %p276 = por %p274, %p275
      %p277 = scmp.ne.s32.totalorder %s266, %s267
      %p278 = scmp.eq.s32.totalorder %s38, 0
      %p279 = por %p277, %p278
      %p280 = scmp.ne.s32.totalorder %s266, %s267
      %p281 = scmp.eq.s32.totalorder %s39, 3
      %p282 = por %p280, %p281
      %p284 = scmp.ne.s32.totalorder %s267, %s283
      %p285 = scmp.eq.s32.totalorder %s39, 0
      %p286 = por %p284, %p285
      %s287 = ssub.s32 %s41, %s48
      %p288 = scmp.eq.s32.totalorder %s287, 0
      %s290 = sadd.s32 %s289, 1
      %s291 = scalar_select %p288, %s289, %s290
      %p294 = pneg %p288
      %p295 = scmp.eq.s32.totalorder %s33, 3
      %p296 = por %p294, %p295
      %p297 = scmp.ne.s32.totalorder %s289, %s292
      %p298 = scmp.eq.s32.totalorder %s33, 0
      %p299 = por %p297, %p298
      %p300 = scmp.ne.s32.totalorder %s289, %s292
      %p301 = scmp.eq.s32.totalorder %s38, 3
      %p302 = por %p300, %p301
      %p303 = scmp.ne.s32.totalorder %s292, %s293
      %p304 = scmp.eq.s32.totalorder %s38, 0
      %p305 = por %p303, %p304
      %p306 = scmp.ne.s32.totalorder %s292, %s293
      %p307 = scmp.eq.s32.totalorder %s39, 3
      %p308 = por %p306, %p307
      %p310 = scmp.ne.s32.totalorder %s293, %s309
      %p311 = scmp.eq.s32.totalorder %s39, 0
      %p312 = por %p310, %p311
      %s313 = ssub.s32 %s41, %s48
      %p314 = scmp.eq.s32.totalorder %s313, 0
      %s316 = sadd.s32 %s315, 1
      %s317 = scalar_select %p314, %s315, %s316
      %p320 = pneg %p314
      %p321 = scmp.eq.s32.totalorder %s33, 3
      %p322 = por %p320, %p321
      %p323 = scmp.ne.s32.totalorder %s315, %s318
      %p324 = scmp.eq.s32.totalorder %s33, 0
      %p325 = por %p323, %p324
      %p326 = scmp.ne.s32.totalorder %s315, %s318
      %p327 = scmp.eq.s32.totalorder %s38, 3
      %p328 = por %p326, %p327
      %p329 = scmp.ne.s32.totalorder %s318, %s319
      %p330 = scmp.eq.s32.totalorder %s38, 0
      %p331 = por %p329, %p330
      %p332 = scmp.ne.s32.totalorder %s318, %s319
      %p333 = scmp.eq.s32.totalorder %s39, 3
      %p334 = por %p332, %p333
      %p336 = scmp.ne.s32.totalorder %s319, %s335
      %p337 = scmp.eq.s32.totalorder %s39, 0
      %p338 = por %p336, %p337
      %s339 = ssub.s32 %s41, %s48
      %p340 = scmp.eq.s32.totalorder %s339, 0
      %s342 = sadd.s32 %s341, 1
      %s343 = scalar_select %p340, %s341, %s342
      %p346 = pneg %p340
      %p347 = scmp.eq.s32.totalorder %s33, 3
      %p348 = por %p346, %p347
      %p349 = scmp.ne.s32.totalorder %s341, %s344
      %p350 = scmp.eq.s32.totalorder %s33, 0
      %p351 = por %p349, %p350
      %p352 = scmp.ne.s32.totalorder %s341, %s344
      %p353 = scmp.eq.s32.totalorder %s38, 3
      %p354 = por %p352, %p353
      %p355 = scmp.ne.s32.totalorder %s344, %s345
      %p356 = scmp.eq.s32.totalorder %s38, 0
      %p357 = por %p355, %p356
      %p358 = scmp.ne.s32.totalorder %s344, %s345
      %p359 = scmp.eq.s32.totalorder %s39, 3
      %p360 = por %p358, %p359
      %p362 = scmp.ne.s32.totalorder %s345, %s361
      %p363 = scmp.eq.s32.totalorder %s39, 0
      %p364 = por %p362, %p363
      %s365 = ssub.s32 %s41, %s48
      %p366 = scmp.eq.s32.totalorder %s365, 0
      %s368 = sadd.s32 %s367, 1
      %s369 = scalar_select %p366, %s367, %s368
      %p372 = pneg %p366
      %p373 = scmp.eq.s32.totalorder %s33, 3
      %p374 = por %p372, %p373
      %p375 = scmp.ne.s32.totalorder %s367, %s370
      %p376 = scmp.eq.s32.totalorder %s33, 0
      %p377 = por %p375, %p376
      %p378 = scmp.ne.s32.totalorder %s367, %s370
      %p379 = scmp.eq.s32.totalorder %s38, 3
      %p380 = por %p378, %p379
      %p381 = scmp.ne.s32.totalorder %s370, %s371
      %p382 = scmp.eq.s32.totalorder %s38, 0
      %p383 = por %p381, %p382
      %p384 = scmp.ne.s32.totalorder %s370, %s371
      %p385 = scmp.eq.s32.totalorder %s39, 3
      %p386 = por %p384, %p385
      %p388 = scmp.ne.s32.totalorder %s371, %s387
      %p389 = scmp.eq.s32.totalorder %s39, 0
      %p390 = por %p388, %p389
      %s391 = ssub.s32 %s41, %s48
      %p392 = scmp.eq.s32.totalorder %s391, 0
      %s394 = sadd.s32 %s393, 1
      %s395 = scalar_select %p392, %s393, %s394
      %p398 = pneg %p392
      %p399 = scmp.eq.s32.totalorder %s33, 3
      %p400 = por %p398, %p399
      %p401 = scmp.ne.s32.totalorder %s393, %s396
      %p402 = scmp.eq.s32.totalorder %s33, 0
      %p403 = por %p401, %p402
      %p404 = scmp.ne.s32.totalorder %s393, %s396
      %p405 = scmp.eq.s32.totalorder %s38, 3
      %p406 = por %p404, %p405
      %p407 = scmp.ne.s32.totalorder %s396, %s397
      %p408 = scmp.eq.s32.totalorder %s38, 0
      %p409 = por %p407, %p408
      %p410 = scmp.ne.s32.totalorder %s396, %s397
      %p411 = scmp.eq.s32.totalorder %s39, 3
      %p412 = por %p410, %p411
      %p414 = scmp.ne.s32.totalorder %s397, %s413
      %p415 = scmp.eq.s32.totalorder %s39, 0
      %p416 = por %p414, %p415
      %s417 = ssub.s32 %s41, %s48
      %p418 = scmp.eq.s32.totalorder %s417, 0
      %s420 = sadd.s32 %s419, 1
      %s421 = scalar_select %p418, %s419, %s420
      %p424 = pneg %p418
      %p425 = scmp.eq.s32.totalorder %s33, 3
      %p426 = por %p424, %p425
      %p427 = scmp.ne.s32.totalorder %s419, %s422
      %p428 = scmp.eq.s32.totalorder %s33, 0
      %p429 = por %p427, %p428
      %p430 = scmp.ne.s32.totalorder %s419, %s422
      %p431 = scmp.eq.s32.totalorder %s38, 3
      %p432 = por %p430, %p431
      %p433 = scmp.ne.s32.totalorder %s422, %s423
      %p434 = scmp.eq.s32.totalorder %s38, 0
      %p435 = por %p433, %p434
      %p436 = scmp.ne.s32.totalorder %s422, %s423
      %p437 = scmp.eq.s32.totalorder %s39, 3
      %p438 = por %p436, %p437
      %p440 = scmp.ne.s32.totalorder %s423, %s439
      %p441 = scmp.eq.s32.totalorder %s39, 0
      %p442 = por %p440, %p441
      %s443 = ssub.s32 %s41, %s48
      %p444 = scmp.eq.s32.totalorder %s443, 0
      %s446 = sadd.s32 %s445, 1
      %s447 = scalar_select %p444, %s445, %s446
      %p450 = pneg %p444
      %p451 = scmp.eq.s32.totalorder %s33, 3
      %p452 = por %p450, %p451
      %p453 = scmp.ne.s32.totalorder %s445, %s448
      %p454 = scmp.eq.s32.totalorder %s33, 0
      %p455 = por %p453, %p454
      %p456 = scmp.ne.s32.totalorder %s445, %s448
      %p457 = scmp.eq.s32.totalorder %s38, 3
      %p458 = por %p456, %p457
      %p459 = scmp.ne.s32.totalorder %s448, %s449
      %p460 = scmp.eq.s32.totalorder %s38, 0
      %p461 = por %p459, %p460
      %p462 = scmp.ne.s32.totalorder %s448, %s449
      %p463 = scmp.eq.s32.totalorder %s39, 3
      %p464 = por %p462, %p463
      %p466 = scmp.ne.s32.totalorder %s449, %s465
      %p467 = scmp.eq.s32.totalorder %s39, 0
      %p468 = por %p466, %p467
      %s469 = ssub.s32 %s41, %s48
      %p470 = scmp.eq.s32.totalorder %s469, 0
      %s472 = sadd.s32 %s471, 1
      %s473 = scalar_select %p470, %s471, %s472
      %p476 = pneg %p470
      %p477 = scmp.eq.s32.totalorder %s33, 3
      %p478 = por %p476, %p477
      %p479 = scmp.ne.s32.totalorder %s471, %s474
      %p480 = scmp.eq.s32.totalorder %s33, 0
      %p481 = por %p479, %p480
      %p482 = scmp.ne.s32.totalorder %s471, %s474
      %p483 = scmp.eq.s32.totalorder %s38, 3
      %p484 = por %p482, %p483
      %p485 = scmp.ne.s32.totalorder %s474, %s475
      %p486 = scmp.eq.s32.totalorder %s38, 0
      %p487 = por %p485, %p486
      %p488 = scmp.ne.s32.totalorder %s474, %s475
      %p489 = scmp.eq.s32.totalorder %s39, 3
      %p490 = por %p488, %p489
      %p492 = scmp.ne.s32.totalorder %s475, %s491
      %p493 = scmp.eq.s32.totalorder %s39, 0
      %p494 = por %p492, %p493
      %s495 = ssub.s32 %s41, %s48
      %p496 = scmp.eq.s32.totalorder %s495, 0
      %s498 = sadd.s32 %s497, 1
      %s499 = scalar_select %p496, %s497, %s498
      %p502 = pneg %p496
      %p503 = scmp.eq.s32.totalorder %s33, 3
      %p504 = por %p502, %p503
      %p505 = scmp.ne.s32.totalorder %s497, %s500
      %p506 = scmp.eq.s32.totalorder %s33, 0
      %p507 = por %p505, %p506
      %p508 = scmp.ne.s32.totalorder %s497, %s500
      %p509 = scmp.eq.s32.totalorder %s38, 3
      %p510 = por %p508, %p509
      %p511 = scmp.ne.s32.totalorder %s500, %s501
      %p512 = scmp.eq.s32.totalorder %s38, 0
      %p513 = por %p511, %p512
      %p514 = scmp.ne.s32.totalorder %s500, %s501
      %p515 = scmp.eq.s32.totalorder %s39, 3
      %p516 = por %p514, %p515
      %p518 = scmp.ne.s32.totalorder %s501, %s517
      %p519 = scmp.eq.s32.totalorder %s39, 0
      %p520 = por %p518, %p519
      %s521 = ssub.s32 %s40, %s52
      %p522 = scmp.eq.s32.totalorder %s521, 0
      %s524 = sadd.s32 %s523, 1
      %s525 = scalar_select %p522, %s523, %s524
      %p528 = pneg %p522
      %p529 = scmp.eq.s32.totalorder %s33, 3
      %p530 = por %p528, %p529
      %p531 = scmp.ne.s32.totalorder %s523, %s526
      %p532 = scmp.eq.s32.totalorder %s33, 0
      %p533 = por %p531, %p532
      %p534 = scmp.ne.s32.totalorder %s523, %s526
      %p535 = scmp.eq.s32.totalorder %s38, 3
      %p536 = por %p534, %p535
      %p537 = scmp.ne.s32.totalorder %s526, %s527
      %p538 = scmp.eq.s32.totalorder %s38, 0
      %p539 = por %p537, %p538
      %p540 = scmp.ne.s32.totalorder %s526, %s527
      %p541 = scmp.eq.s32.totalorder %s39, 3
      %p542 = por %p540, %p541
      %p544 = scmp.ne.s32.totalorder %s527, %s543
      %p545 = scmp.eq.s32.totalorder %s39, 0
      %p546 = por %p544, %p545
      %p547 = scmp.le.s32.totalorder 1, %s33
      %p548 = scmp.lt.s32.totalorder %s33, 5
      %p549 = pnand %p547, %p548
      %p550 = pneg %p549
      // Predicated region
      $region9: #{tpu_custom_call.1} parent=5 // pred_check
        _
      $region10: #{tpu_custom_call.1} parent=5 // pred_check_branch
        %552 = sbr.rel (%p549) target = $region12
      $region11: #{tpu_custom_call.1} parent=5 // pred_region
        %s553 = ssub.s32 %s33, 1
      $region12: #{tpu_custom_call.1} parent=5 // pred_fallthru
        _
      %p554 = scmp.lt.s32.totalorder %s33, 4
      // Predicated region
      $region13: #{tpu_custom_call.1} parent=5 // pred_check
        %p555 = pneg %p554
      $region14: #{tpu_custom_call.1} parent=5 // pred_check_branch
        %557 = sbr.rel (%p555) target = $region16
      $region15: #{tpu_custom_call.1} parent=5 // pred_region
        // Predicated region
        $region17: #{tpu_custom_call.1} parent=15 // pred_check
          %p558 = pneg %p65
        $region18: #{tpu_custom_call.1} parent=15 // pred_check_branch
          %560 = sbr.rel (%p558) target = $region20
        $region19: #{tpu_custom_call.1} parent=15 // pred_region
          %s561 = sand.u32 %s55, 1
          %s562 = scalar_lea.sflag [#allocation4], %s561
          %s563 = sand.u32 %s55, 1
          %s564 = smul.addr %s563, 8
          %s565 = scalar_lea.vmem [#allocation3], %s564
          %s567 = ssub.s32 128, 128
          %568 = vsyncadd %s562, %s567
          %s569 = smul.addr %s40, 128
          %s570 = scalar_lea.hbm %s0, %s569
          %s572 = sshll.u32 %s565, 4
          %s573 = int_to_ptr.vmem [resolvable:$true] %s572
          %575 = dma.hbm_to_vmem [thread:$0]  %s570, 128, %s573, %s562
        $region20: #{tpu_custom_call.1} parent=15 // pred_fallthru
          _
        // Predicated region
        $region21: #{tpu_custom_call.1} parent=15 // pred_check
          %p576 = pneg %p91
        $region22: #{tpu_custom_call.1} parent=15 // pred_check_branch
          %578 = sbr.rel (%p576) target = $region24
        $region23: #{tpu_custom_call.1} parent=15 // pred_region
          %p579 = scmp.lt.s32.totalorder %s40, 1
          %s580 = scalar_select %p579, %s40, 1
          %s581 = scalar_lea.vmem %s1, %s580
        $region24: #{tpu_custom_call.1} parent=15 // pred_fallthru
          _
        // Predicated region
        $region25: #{tpu_custom_call.1} parent=15 // pred_check
          %p582 = pneg %p117
        $region26: #{tpu_custom_call.1} parent=15 // pred_check_branch
          %584 = sbr.rel (%p582) target = $region28
        $region27: #{tpu_custom_call.1} parent=15 // pred_region
          %p585 = scmp.lt.s32.totalorder %s41, 1
          %s586 = scalar_select %p585, %s41, 1
          %s587 = smul.addr %s586, 4
          %s588 = smul.addr %s587, 4
          %s589 = scalar_lea.vmem %s2, %s588
        $region28: #{tpu_custom_call.1} parent=15 // pred_fallthru
          _
        // Predicated region
        $region29: #{tpu_custom_call.1} parent=15 // pred_check
          %p590 = pneg %p143
        $region30: #{tpu_custom_call.1} parent=15 // pred_check_branch
          %592 = sbr.rel (%p590) target = $region32
        $region31: #{tpu_custom_call.1} parent=15 // pred_region
          %p593 = scmp.lt.s32.totalorder %s41, 1
          %s594 = scalar_select %p593, %s41, 1
          %s595 = scalar_lea.vmem %s3, %s594
        $region32: #{tpu_custom_call.1} parent=15 // pred_fallthru
          _
        // Predicated region
        $region33: #{tpu_custom_call.1} parent=15 // pred_check
          %p596 = pneg %p169
        $region34: #{tpu_custom_call.1} parent=15 // pred_check_branch
          %598 = sbr.rel (%p596) target = $region36
        $region35: #{tpu_custom_call.1} parent=15 // pred_region
          %p599 = scmp.lt.s32.totalorder %s41, 1
          %s600 = scalar_select %p599, %s41, 1
          %s601 = smul.addr %s600, 4
          %s602 = smul.addr %s601, 4
          %s603 = scalar_lea.vmem %s4, %s602
        $region36: #{tpu_custom_call.1} parent=15 // pred_fallthru
          _
        // Predicated region
        $region37: #{tpu_custom_call.1} parent=15 // pred_check
          %p604 = pneg %p195
        $region38: #{tpu_custom_call.1} parent=15 // pred_check_branch
          %606 = sbr.rel (%p604) target = $region40
        $region39: #{tpu_custom_call.1} parent=15 // pred_region
          %p607 = scmp.lt.s32.totalorder %s41, 1
          %s608 = scalar_select %p607, %s41, 1
          %s609 = scalar_lea.vmem %s5, %s608
        $region40: #{tpu_custom_call.1} parent=15 // pred_fallthru
          _
        // Predicated region
        $region41: #{tpu_custom_call.1} parent=15 // pred_check
          %p610 = pneg %p221
        $region42: #{tpu_custom_call.1} parent=15 // pred_check_branch
          %612 = sbr.rel (%p610) target = $region44
        $region43: #{tpu_custom_call.1} parent=15 // pred_region
          %p613 = scmp.lt.s32.totalorder %s41, 1
          %s614 = scalar_select %p613, %s41, 1
          %s615 = smul.addr %s614, 4
          %s616 = smul.addr %s615, 4
          %s617 = scalar_lea.vmem %s6, %s616
        $region44: #{tpu_custom_call.1} parent=15 // pred_fallthru
          _
        // Predicated region
        $region45: #{tpu_custom_call.1} parent=15 // pred_check
          %p618 = pneg %p247
        $region46: #{tpu_custom_call.1} parent=15 // pred_check_branch
          %620 = sbr.rel (%p618) target = $region48
        $region47: #{tpu_custom_call.1} parent=15 // pred_region
          %p621 = scmp.lt.s32.totalorder %s41, 1
          %s622 = scalar_select %p621, %s41, 1
          %s623 = scalar_lea.vmem %s7, %s622
        $region48: #{tpu_custom_call.1} parent=15 // pred_fallthru
          _
        // Predicated region
        $region49: #{tpu_custom_call.1} parent=15 // pred_check
          %p624 = pneg %p273
        $region50: #{tpu_custom_call.1} parent=15 // pred_check_branch
          %626 = sbr.rel (%p624) target = $region52
        $region51: #{tpu_custom_call.1} parent=15 // pred_region
          %s627 = sand.u32 %s33, 1
          %s628 = scalar_lea.sflag [#allocation7], %s627
          %s629 = sand.u32 %s263, 1
          %s630 = smul.addr %s629, 16
          %s631 = scalar_lea.vmem [#allocation6], %s630
          %s633 = ssub.s32 256, 256
          %634 = vsyncadd %s628, %s633
          %s635 = smul.addr %s41, 4
          %s636 = smul.addr %s635, 64
          %s637 = scalar_lea.hbm %s8, %s636
          %s638 = sshll.u32 %s631, 4
          %s639 = int_to_ptr.vmem [resolvable:$true] %s638
          %644 = dma.hbm_to_vmem [thread:$0]  %s637, 256, %s639, %s628, 64, 64, 4
        $region52: #{tpu_custom_call.1} parent=15 // pred_fallthru
          _
        // Predicated region
        $region53: #{tpu_custom_call.1} parent=15 // pred_check
          %p645 = pneg %p299
        $region54: #{tpu_custom_call.1} parent=15 // pred_check_branch
          %647 = sbr.rel (%p645) target = $region56
        $region55: #{tpu_custom_call.1} parent=15 // pred_region
          %p648 = scmp.lt.s32.totalorder %s41, 1
          %s649 = scalar_select %p648, %s41, 1
          %s650 = scalar_lea.vmem %s9, %s649
        $region56: #{tpu_custom_call.1} parent=15 // pred_fallthru
          _
        // Predicated region
        $region57: #{tpu_custom_call.1} parent=15 // pred_check
          %p651 = pneg %p325
        $region58: #{tpu_custom_call.1} parent=15 // pred_check_branch
          %653 = sbr.rel (%p651) target = $region60
        $region59: #{tpu_custom_call.1} parent=15 // pred_region
          %p654 = scmp.lt.s32.totalorder %s41, 1
          %s655 = scalar_select %p654, %s41, 1
          %s656 = scalar_lea.vmem %s10, %s655
        $region60: #{tpu_custom_call.1} parent=15 // pred_fallthru
          _
        // Predicated region
        $region61: #{tpu_custom_call.1} parent=15 // pred_check
          %p657 = pneg %p351
        $region62: #{tpu_custom_call.1} parent=15 // pred_check_branch
          %659 = sbr.rel (%p657) target = $region64
        $region63: #{tpu_custom_call.1} parent=15 // pred_region
          %p660 = scmp.lt.s32.totalorder %s41, 1
          %s661 = scalar_select %p660, %s41, 1
          %s662 = scalar_lea.vmem %s11, %s661
        $region64: #{tpu_custom_call.1} parent=15 // pred_fallthru
          _
        // Predicated region
        $region65: #{tpu_custom_call.1} parent=15 // pred_check
          %p663 = pneg %p377
        $region66: #{tpu_custom_call.1} parent=15 // pred_check_branch
          %665 = sbr.rel (%p663) target = $region68
        $region67: #{tpu_custom_call.1} parent=15 // pred_region
          %s666 = sand.u32 %s33, 1
          %s667 = scalar_lea.sflag [#allocation7], %s666
          %s668 = sand.u32 %s367, 1
          %s669 = smul.addr %s668, 16
          %s670 = scalar_lea.vmem [#allocation8], %s669
          %s672 = ssub.s32 256, 256
          %673 = vsyncadd %s667, %s672
          %s674 = smul.addr %s41, 4
          %s675 = smul.addr %s674, 64
          %s676 = scalar_lea.hbm %s12, %s675
          %s677 = sshll.u32 %s670, 4
          %s678 = int_to_ptr.vmem [resolvable:$true] %s677
          %683 = dma.hbm_to_vmem [thread:$0]  %s676, 256, %s678, %s667, 64, 64, 4
        $region68: #{tpu_custom_call.1} parent=15 // pred_fallthru
          _
        // Predicated region
        $region69: #{tpu_custom_call.1} parent=15 // pred_check
          %p684 = pneg %p403
        $region70: #{tpu_custom_call.1} parent=15 // pred_check_branch
          %686 = sbr.rel (%p684) target = $region72
        $region71: #{tpu_custom_call.1} parent=15 // pred_region
          %p687 = scmp.lt.s32.totalorder %s41, 1
          %s688 = scalar_select %p687, %s41, 1
          %s689 = scalar_lea.vmem %s13, %s688
        $region72: #{tpu_custom_call.1} parent=15 // pred_fallthru
          _
        // Predicated region
        $region73: #{tpu_custom_call.1} parent=15 // pred_check
          %p690 = pneg %p429
        $region74: #{tpu_custom_call.1} parent=15 // pred_check_branch
          %692 = sbr.rel (%p690) target = $region76
        $region75: #{tpu_custom_call.1} parent=15 // pred_region
          %p693 = scmp.lt.s32.totalorder %s41, 1
          %s694 = scalar_select %p693, %s41, 1
          %s695 = smul.addr %s694, 8
          %s696 = smul.addr %s695, 4
          %s697 = scalar_lea.vmem %s14, %s696
        $region76: #{tpu_custom_call.1} parent=15 // pred_fallthru
          _
        // Predicated region
        $region77: #{tpu_custom_call.1} parent=15 // pred_check
          %p698 = pneg %p455
        $region78: #{tpu_custom_call.1} parent=15 // pred_check_branch
          %700 = sbr.rel (%p698) target = $region80
        $region79: #{tpu_custom_call.1} parent=15 // pred_region
          %p701 = scmp.lt.s32.totalorder %s41, 1
          %s702 = scalar_select %p701, %s41, 1
          %s703 = scalar_lea.vmem %s15, %s702
        $region80: #{tpu_custom_call.1} parent=15 // pred_fallthru
          _
        // Predicated region
        $region81: #{tpu_custom_call.1} parent=15 // pred_check
          %p704 = pneg %p481
        $region82: #{tpu_custom_call.1} parent=15 // pred_check_branch
          %706 = sbr.rel (%p704) target = $region84
        $region83: #{tpu_custom_call.1} parent=15 // pred_region
          %p707 = scmp.lt.s32.totalorder %s41, 1
          %s708 = scalar_select %p707, %s41, 1
          %s709 = scalar_lea.vmem %s16, %s708
        $region84: #{tpu_custom_call.1} parent=15 // pred_fallthru
          _
        // Predicated region
        $region85: #{tpu_custom_call.1} parent=15 // pred_check
          %p710 = pneg %p507
        $region86: #{tpu_custom_call.1} parent=15 // pred_check_branch
          %712 = sbr.rel (%p710) target = $region88
        $region87: #{tpu_custom_call.1} parent=15 // pred_region
          %p713 = scmp.lt.s32.totalorder %s41, 1
          %s714 = scalar_select %p713, %s41, 1
          %s715 = scalar_lea.vmem %s17, %s714
        $region88: #{tpu_custom_call.1} parent=15 // pred_fallthru
          _
      $region16: #{tpu_custom_call.1} parent=5 // pred_fallthru
        _
      %p716 = scmp.le.s32.totalorder 1, %s33
      %p717 = scmp.lt.s32.totalorder %s33, 5
      %p718 = pnand %p716, %p717
      %p719 = pneg %p718
      // Predicated region
      $region89: #{tpu_custom_call.1} parent=5 // pred_check
        _
      $region90: #{tpu_custom_call.1} parent=5 // pred_check_branch
        %721 = sbr.rel (%p718) target = $region92
      $region91: #{tpu_custom_call.1} parent=5 // pred_region
        %s722 = ssub.s32 %s33, 1
        %s723 = sand.u32 %s58, 1
        %s724 = scalar_lea.sflag [#allocation4], %s723
        %s725 = sand.u32 %s58, 1
        %s726 = smul.addr %s725, 8
        %s727 = scalar_lea.vmem [#allocation3], %s726
        // Predicated region
        $region93: #{tpu_custom_call.1} parent=91 // pred_check
          %p728 = pneg %p71
        $region94: #{tpu_custom_call.1} parent=91 // pred_check_branch
          %730 = sbr.rel (%p728) target = $region96
        $region95: #{tpu_custom_call.1} parent=91 // pred_region
          %731 = dma.done %s724, 128
        $region96: #{tpu_custom_call.1} parent=91 // pred_fallthru
          _
        %s732 = sand.u32 %s38, 1
        %s733 = scalar_lea.sflag [#allocation7], %s732
        %s734 = sand.u32 %s266, 1
        %s735 = smul.addr %s734, 16
        %s736 = scalar_lea.vmem [#allocation6], %s735
        // Predicated region
        $region97: #{tpu_custom_call.1} parent=91 // pred_check
          %p737 = pneg %p279
        $region98: #{tpu_custom_call.1} parent=91 // pred_check_branch
          %739 = sbr.rel (%p737) target = $region100
        $region99: #{tpu_custom_call.1} parent=91 // pred_region
          %740 = dma.done %s733, 256
        $region100: #{tpu_custom_call.1} parent=91 // pred_fallthru
          _
        %s741 = sand.u32 %s38, 1
        %s742 = scalar_lea.sflag [#allocation7], %s741
        %s743 = sand.u32 %s370, 1
        %s744 = smul.addr %s743, 16
        %s745 = scalar_lea.vmem [#allocation8], %s744
        // Predicated region
        $region101: #{tpu_custom_call.1} parent=91 // pred_check
          %p746 = pneg %p383
        $region102: #{tpu_custom_call.1} parent=91 // pred_check_branch
          %748 = sbr.rel (%p746) target = $region104
        $region103: #{tpu_custom_call.1} parent=91 // pred_region
          %749 = dma.done %s742, 256
        $region104: #{tpu_custom_call.1} parent=91 // pred_fallthru
          _
        %s750 = sand.u32 %s58, 1
        %s751 = scalar_lea.sflag [#allocation4], %s750
        %s752 = sand.u32 %s58, 1
        %s753 = smul.addr %s752, 8
        %s754 = scalar_lea.vmem [#allocation3], %s753
        %p755 = pneg %p71
        %p756 = pneg %p68
        %p757 = scmp.lt.s32.totalorder %s42, 1
        %s758 = scalar_select %p757, %s42, 1
        %s759 = scalar_lea.vmem %s1, %s758
        %p760 = pneg %p97
        %p761 = pneg %p94
        %p762 = scmp.lt.s32.totalorder %s43, 1
        %s763 = scalar_select %p762, %s43, 1
        %s764 = smul.addr %s763, 4
        %s765 = smul.addr %s764, 4
        %s766 = scalar_lea.vmem %s2, %s765
        %p767 = pneg %p123
        %p768 = pneg %p120
        %p769 = scmp.lt.s32.totalorder %s43, 1
        %s770 = scalar_select %p769, %s43, 1
        %s771 = scalar_lea.vmem %s3, %s770
        %p772 = pneg %p149
        %p773 = pneg %p146
        %p774 = scmp.lt.s32.totalorder %s43, 1
        %s775 = scalar_select %p774, %s43, 1
        %s776 = smul.addr %s775, 4
        %s777 = smul.addr %s776, 4
        %s778 = scalar_lea.vmem %s4, %s777
        %p779 = pneg %p175
        %p780 = pneg %p172
        %p781 = scmp.lt.s32.totalorder %s43, 1
        %s782 = scalar_select %p781, %s43, 1
        %s783 = scalar_lea.vmem %s5, %s782
        %p784 = pneg %p201
        %p785 = pneg %p198
        %p786 = scmp.lt.s32.totalorder %s43, 1
        %s787 = scalar_select %p786, %s43, 1
        %s788 = smul.addr %s787, 4
        %s789 = smul.addr %s788, 4
        %s790 = scalar_lea.vmem %s6, %s789
        %p791 = pneg %p227
        %p792 = pneg %p224
        %p793 = scmp.lt.s32.totalorder %s43, 1
        %s794 = scalar_select %p793, %s43, 1
        %s795 = scalar_lea.vmem %s7, %s794
        %p796 = pneg %p253
        %p797 = pneg %p250
        %s798 = sand.u32 %s38, 1
        %s799 = scalar_lea.sflag [#allocation7], %s798
        %s800 = sand.u32 %s266, 1
        %s801 = smul.addr %s800, 16
        %s802 = scalar_lea.vmem [#allocation6], %s801
        %p803 = pneg %p279
        %p804 = pneg %p276
        %p805 = scmp.lt.s32.totalorder %s43, 1
        %s806 = scalar_select %p805, %s43, 1
        %s807 = scalar_lea.vmem %s9, %s806
        %p808 = pneg %p305
        %p809 = pneg %p302
        %p810 = scmp.lt.s32.totalorder %s43, 1
        %s811 = scalar_select %p810, %s43, 1
        %s812 = scalar_lea.vmem %s10, %s811
        %p813 = pneg %p331
        %p814 = pneg %p328
        %p815 = scmp.lt.s32.totalorder %s43, 1
        %s816 = scalar_select %p815, %s43, 1
        %s817 = scalar_lea.vmem %s11, %s816
        %p818 = pneg %p357
        %p819 = pneg %p354
        %s820 = sand.u32 %s38, 1
        %s821 = scalar_lea.sflag [#allocation7], %s820
        %s822 = sand.u32 %s370, 1
        %s823 = smul.addr %s822, 16
        %s824 = scalar_lea.vmem [#allocation8], %s823
        %p825 = pneg %p383
        %p826 = pneg %p380
        %p827 = scmp.lt.s32.totalorder %s43, 1
        %s828 = scalar_select %p827, %s43, 1
        %s829 = scalar_lea.vmem %s13, %s828
        %p830 = pneg %p409
        %p831 = pneg %p406
        %p832 = scmp.lt.s32.totalorder %s43, 1
        %s833 = scalar_select %p832, %s43, 1
        %s834 = smul.addr %s833, 8
        %s835 = smul.addr %s834, 4
        %s836 = scalar_lea.vmem %s14, %s835
        %p837 = pneg %p435
        %p838 = pneg %p432
        %p839 = scmp.lt.s32.totalorder %s43, 1
        %s840 = scalar_select %p839, %s43, 1
        %s841 = scalar_lea.vmem %s15, %s840
        %p842 = pneg %p461
        %p843 = pneg %p458
        %p844 = scmp.lt.s32.totalorder %s43, 1
        %s845 = scalar_select %p844, %s43, 1
        %s846 = scalar_lea.vmem %s16, %s845
        %p847 = pneg %p487
        %p848 = pneg %p484
        %p849 = scmp.lt.s32.totalorder %s43, 1
        %s850 = scalar_select %p849, %s43, 1
        %s851 = scalar_lea.vmem %s17, %s850
        %p852 = pneg %p513
        %p853 = pneg %p510
        %p854 = pneg %p539
        %p855 = pneg %p536
        %s856 = sand.u32 %s526, 1
        %s857 = scalar_lea.sflag [#allocation5], %s856
        %s858 = sand.u32 %s526, 1
        %s859 = smul.addr %s858, 8
        %s860 = scalar_lea.vmem [#allocation9], %s859
        %p861 = scmp.lt.s32.totalorder %s42, 1
        %s862 = scalar_select %p861, %s42, 1
        %s863 = scalar_lea.vmem %s1, %s862
        %p864 = scmp.lt.s32.totalorder %s43, 1
        %s865 = scalar_select %p864, %s43, 1
        %s866 = smul.addr %s865, 4
        %s867 = smul.addr %s866, 4
        %s868 = scalar_lea.vmem %s2, %s867
        %p869 = scmp.lt.s32.totalorder %s43, 1
        %s870 = scalar_select %p869, %s43, 1
        %s871 = scalar_lea.vmem %s3, %s870
        %p872 = scmp.lt.s32.totalorder %s43, 1
        %s873 = scalar_select %p872, %s43, 1
        %s874 = smul.addr %s873, 4
        %s875 = smul.addr %s874, 4
        %s876 = scalar_lea.vmem %s4, %s875
        %p877 = scmp.lt.s32.totalorder %s43, 1
        %s878 = scalar_select %p877, %s43, 1
        %s879 = scalar_lea.vmem %s5, %s878
        %p880 = scmp.lt.s32.totalorder %s43, 1
        %s881 = scalar_select %p880, %s43, 1
        %s882 = smul.addr %s881, 4
        %s883 = smul.addr %s882, 4
        %s884 = scalar_lea.vmem %s6, %s883
        %p885 = scmp.lt.s32.totalorder %s43, 1
        %s886 = scalar_select %p885, %s43, 1
        %s887 = scalar_lea.vmem %s7, %s886
        %p888 = scmp.lt.s32.totalorder %s43, 1
        %s889 = scalar_select %p888, %s43, 1
        %s890 = scalar_lea.vmem %s9, %s889
        %p891 = scmp.lt.s32.totalorder %s43, 1
        %s892 = scalar_select %p891, %s43, 1
        %s893 = scalar_lea.vmem %s10, %s892
        %p894 = scmp.lt.s32.totalorder %s43, 1
        %s895 = scalar_select %p894, %s43, 1
        %s896 = scalar_lea.vmem %s11, %s895
        %p897 = scmp.lt.s32.totalorder %s43, 1
        %s898 = scalar_select %p897, %s43, 1
        %s899 = scalar_lea.vmem %s13, %s898
        %p900 = scmp.lt.s32.totalorder %s43, 1
        %s901 = scalar_select %p900, %s43, 1
        %s902 = smul.addr %s901, 8
        %s903 = smul.addr %s902, 4
        %s904 = scalar_lea.vmem %s14, %s903
        %p905 = scmp.lt.s32.totalorder %s43, 1
        %s906 = scalar_select %p905, %s43, 1
        %s907 = scalar_lea.vmem %s15, %s906
        %p908 = scmp.lt.s32.totalorder %s43, 1
        %s909 = scalar_select %p908, %s43, 1
        %s910 = scalar_lea.vmem %s16, %s909
        %p911 = scmp.lt.s32.totalorder %s43, 1
        %s912 = scalar_select %p911, %s43, 1
        %s913 = scalar_lea.vmem %s17, %s912
        %p915 = scmp.eq.s32.totalorder %s43, 0
        // Predicated region
        $region105: #{tpu_custom_call.1} parent=91 // pred_check
          %p916 = pneg %p915
        $region106: #{tpu_custom_call.1} parent=91 // pred_check_branch
          %918 = sbr.rel (%p916) target = $region108
        $region107: #{tpu_custom_call.1} parent=91 // pred_region
          %v919 = vld [vmem:[%s727] sm:$0xff]
          %vm920 = vcmask 261120
          %921 = vst.msk [vmem:[%s860] sm:$0xff] %vm920, %v919
        $region108: #{tpu_custom_call.1} parent=91 // pred_fallthru
          _
        %v922 = vld [vmem:[%s860] sm:$0xff]
        %v923 = vpack.c.bf16 %v922, %v922
        %v924 = vld [vmem:[%s868] sm:$0xf]
        %v925 = vld [vmem:[%s868 + $0x4] sm:$0xf]
        %v926 = vld [vmem:[%s868 + $0x8] sm:$0xf]
        %v927 = vld [vmem:[%s868 + $0xc] sm:$0xf]
        %v928 = vld [vmem:[%s876] sm:$0xf]
        %v929 = vld [vmem:[%s876 + $0x4] sm:$0xf]
        %v930 = vld [vmem:[%s876 + $0x8] sm:$0xf]
        %v931 = vld [vmem:[%s876 + $0xc] sm:$0xf]
        %v932 = vld [vmem:[%s884] sm:$0xf]
        %v933 = vld [vmem:[%s884 + $0x4] sm:$0xf]
        %v934 = vld [vmem:[%s884 + $0x8] sm:$0xf]
        %v935 = vld [vmem:[%s884 + $0xc] sm:$0xf]
        %v936 = vld [vmem:[%s736] sm:$0xf]
        %v937 = vld [vmem:[%s736 + $0x4] sm:$0xf]
        %v938 = vld [vmem:[%s736 + $0x8] sm:$0xf]
        %v939 = vld [vmem:[%s736 + $0xc] sm:$0xf]
        %v940 = vld [vmem:[%s745] sm:$0xf]
        %v941 = vld [vmem:[%s745 + $0x4] sm:$0xf]
        %v942 = vld [vmem:[%s745 + $0x8] sm:$0xf]
        %v943 = vld [vmem:[%s745 + $0xc] sm:$0xf]
        %v944 = vld [vmem:[%s904] sm:$0xf]
        %v945 = vld [vmem:[%s904 + $0x4] sm:$0xf]
        %v946 = vld [vmem:[%s904 + $0x8] sm:$0xf]
        %v947 = vld [vmem:[%s904 + $0xc] sm:$0xf]
        %v948 = vld [vmem:[%s904 + $0x10] sm:$0xf]
        %v949 = vld [vmem:[%s904 + $0x14] sm:$0xf]
        %v950 = vld [vmem:[%s904 + $0x18] sm:$0xf]
        %v951 = vld [vmem:[%s904 + $0x1c] sm:$0xf]
        %v952 = vld [vmem:[%s871] sm:$0x1]
        %v953 = vld [vmem:[%s879] sm:$0x1]
        %v954 = vld [vmem:[%s887] sm:$0x1]
        %v955 = vld [vmem:[%s890] sm:$0x1]
        %v956 = vld [vmem:[%s899] sm:$0x1]
        %v957 = vld [vmem:[%s907] sm:$0x1]
        %v958 = vld [vmem:[%s893] sm:$0x1]
        %v959 = vld [vmem:[%s896] sm:$0x1]
        %v960 = vld [vmem:[%s910] sm:$0x1]
        %v961 = vld [vmem:[%s913] sm:$0x1]
        %v963 = vlaneseq
        %v964 = vshrl.u32 %v963, 7
        %v965 = vsub.s32 0, %v964
        %v966 = vrot.slane %v952, %v965
        %v972 = vunpack.c.l.b16 %v924
        %v973 = vunpack.c.l.b16 %v925
        %v974 = vunpack.c.l.b16 %v926
        %v975 = vunpack.c.l.b16 %v927
        %v976 = vpack.c.b16 %v973, %v972
        %v977 = vpack.c.b16 %v975, %v974
        %vm980 = vcmask 261120
        %v982 = vsel %vm980, %v923, 0
        %984 = vmatprep.subr.bf16.mxu0 0
        %985 = vmatpush1.bf16.msra.mxu0 %v976
        %986 = vmatprep.subr.bf16.mxu0 0
        %987 = vmatpush1.bf16.msra.mxu0 %v977
        %988 = vmatprep.subr.bf16.mxu0 0
        %989 = vmatpush1.bf16.msra.mxu0 0
        %990 = vmatprep.subr.bf16.mxu0 0
        %991 = vmatpush1.bf16.msra.mxu0 0
        %992 = vmatprep.subr.bf16.mxu0 0
        %993 = vmatpush1.bf16.msra.mxu0 0
        %994 = vmatprep.subr.bf16.mxu0 0
        %995 = vmatpush1.bf16.msra.mxu0 0
        %996 = vmatprep.subr.bf16.mxu0 0
        %997 = vmatpush1.bf16.msra.mxu0 0
        %998 = vmatprep.subr.bf16.mxu0 0
        %999 = vmatpush1.bf16.msra.mxu0 0
        %1000 = vmatprep.subr.bf16.mxu0 0
        %1001 = vmatpush1.bf16.msra.mxu0 0
        %1002 = vmatprep.subr.bf16.mxu0 0
        %1003 = vmatpush1.bf16.msra.mxu0 0
        %1004 = vmatprep.subr.bf16.mxu0 0
        %1005 = vmatpush1.bf16.msra.mxu0 0
        %1006 = vmatprep.subr.bf16.mxu0 0
        %1007 = vmatpush1.bf16.msra.mxu0 0
        %1008 = vmatprep.subr.bf16.mxu0 0
        %1009 = vmatpush1.bf16.msra.mxu0 0
        %1010 = vmatprep.subr.bf16.mxu0 0
        %1011 = vmatpush1.bf16.msra.mxu0 0
        %1012 = vmatprep.subr.bf16.mxu0 0
        %1013 = vmatpush1.bf16.msra.mxu0 0
        %1014 = vmatprep.subr.bf16.mxu0 0
        %1015 = vmatpush1.bf16.msra.mxu0 0
        %1016 = vmatprep.mubr.bf16.mxu0 0
        %1017 = vmatmul.mubr.bf16.gmra.mrb[0].mxu0 %v982
        %v1018 = vpop.f32.mrb[0].mxu0
        %v1019 = vadd.f32 %v966, %v1018
        %v1020 = vpop.f32.mrb[0].mxu0
        %v1021 = vpop.f32.mrb[0].mxu0
        %v1022 = vpop.f32.mrb[0].mxu0
        %1023 = vdwg.mxu0
        %v1024 = vmul.f32 %v1019, 0.35355338
        %v1026 = vlaneseq
        %v1027 = vshrl.u32 %v1026, 7
        %v1028 = vsub.s32 0, %v1027
        %v1029 = vrot.slane %v953, %v1028
        %v1035 = vunpack.c.l.b16 %v928
        %v1036 = vunpack.c.l.b16 %v929
        %v1037 = vunpack.c.l.b16 %v930
        %v1038 = vunpack.c.l.b16 %v931
        %v1039 = vpack.c.b16 %v1036, %v1035
        %v1040 = vpack.c.b16 %v1038, %v1037
        %1043 = vmatprep.subr.bf16.mxu0 0
        %1044 = vmatpush1.bf16.msra.mxu0 %v1039
        %1045 = vmatprep.subr.bf16.mxu0 0
        %1046 = vmatpush1.bf16.msra.mxu0 %v1040
        %1047 = vmatprep.subr.bf16.mxu0 0
        %1048 = vmatpush1.bf16.msra.mxu0 0
        %1049 = vmatprep.subr.bf16.mxu0 0
        %1050 = vmatpush1.bf16.msra.mxu0 0
        %1051 = vmatprep.subr.bf16.mxu0 0
        %1052 = vmatpush1.bf16.msra.mxu0 0
        %1053 = vmatprep.subr.bf16.mxu0 0
        %1054 = vmatpush1.bf16.msra.mxu0 0
        %1055 = vmatprep.subr.bf16.mxu0 0
        %1056 = vmatpush1.bf16.msra.mxu0 0
        %1057 = vmatprep.subr.bf16.mxu0 0
        %1058 = vmatpush1.bf16.msra.mxu0 0
        %1059 = vmatprep.subr.bf16.mxu0 0
        %1060 = vmatpush1.bf16.msra.mxu0 0
        %1061 = vmatprep.subr.bf16.mxu0 0
        %1062 = vmatpush1.bf16.msra.mxu0 0
        %1063 = vmatprep.subr.bf16.mxu0 0
        %1064 = vmatpush1.bf16.msra.mxu0 0
        %1065 = vmatprep.subr.bf16.mxu0 0
        %1066 = vmatpush1.bf16.msra.mxu0 0
        %1067 = vmatprep.subr.bf16.mxu0 0
        %1068 = vmatpush1.bf16.msra.mxu0 0
        %1069 = vmatprep.subr.bf16.mxu0 0
        %1070 = vmatpush1.bf16.msra.mxu0 0
        %1071 = vmatprep.subr.bf16.mxu0 0
        %1072 = vmatpush1.bf16.msra.mxu0 0
        %1073 = vmatprep.subr.bf16.mxu0 0
        %1074 = vmatpush1.bf16.msra.mxu0 0
        %1075 = vmatprep.mubr.bf16.mxu0 0
        %1076 = vmatmul.mubr.bf16.gmra.mrb[0].mxu0 %v982
        %v1077 = vpop.f32.mrb[0].mxu0
        %v1078 = vadd.f32 %v1029, %v1077
        %v1079 = vpop.f32.mrb[0].mxu0
        %v1080 = vpop.f32.mrb[0].mxu0
        %v1081 = vpop.f32.mrb[0].mxu0
        %1082 = vdwg.mxu0
        %v1084 = vlaneseq
        %v1085 = vshrl.u32 %v1084, 7
        %v1086 = vsub.s32 0, %v1085
        %v1087 = vrot.slane %v954, %v1086
        %v1093 = vunpack.c.l.b16 %v932
        %v1094 = vunpack.c.l.b16 %v933
        %v1095 = vunpack.c.l.b16 %v934
        %v1096 = vunpack.c.l.b16 %v935
        %v1097 = vpack.c.b16 %v1094, %v1093
        %v1098 = vpack.c.b16 %v1096, %v1095
        %1101 = vmatprep.subr.bf16.mxu0 0
        %1102 = vmatpush1.bf16.msra.mxu0 %v1097
        %1103 = vmatprep.subr.bf16.mxu0 0
        %1104 = vmatpush1.bf16.msra.mxu0 %v1098
        %1105 = vmatprep.subr.bf16.mxu0 0
        %1106 = vmatpush1.bf16.msra.mxu0 0
        %1107 = vmatprep.subr.bf16.mxu0 0
        %1108 = vmatpush1.bf16.msra.mxu0 0
        %1109 = vmatprep.subr.bf16.mxu0 0
        %1110 = vmatpush1.bf16.msra.mxu0 0
        %1111 = vmatprep.subr.bf16.mxu0 0
        %1112 = vmatpush1.bf16.msra.mxu0 0
        %1113 = vmatprep.subr.bf16.mxu0 0
        %1114 = vmatpush1.bf16.msra.mxu0 0
        %1115 = vmatprep.subr.bf16.mxu0 0
        %1116 = vmatpush1.bf16.msra.mxu0 0
        %1117 = vmatprep.subr.bf16.mxu0 0
        %1118 = vmatpush1.bf16.msra.mxu0 0
        %1119 = vmatprep.subr.bf16.mxu0 0
        %1120 = vmatpush1.bf16.msra.mxu0 0
        %1121 = vmatprep.subr.bf16.mxu0 0
        %1122 = vmatpush1.bf16.msra.mxu0 0
        %1123 = vmatprep.subr.bf16.mxu0 0
        %1124 = vmatpush1.bf16.msra.mxu0 0
        %1125 = vmatprep.subr.bf16.mxu0 0
        %1126 = vmatpush1.bf16.msra.mxu0 0
        %1127 = vmatprep.subr.bf16.mxu0 0
        %1128 = vmatpush1.bf16.msra.mxu0 0
        %1129 = vmatprep.subr.bf16.mxu0 0
        %1130 = vmatpush1.bf16.msra.mxu0 0
        %1131 = vmatprep.subr.bf16.mxu0 0
        %1132 = vmatpush1.bf16.msra.mxu0 0
        %1133 = vmatprep.mubr.bf16.mxu0 0
        %1134 = vmatmul.mubr.bf16.gmra.mrb[0].mxu0 %v982
        %v1135 = vpop.f32.mrb[0].mxu0
        %v1136 = vadd.f32 %v1087, %v1135
        %v1137 = vpop.f32.mrb[0].mxu0
        %v1138 = vpop.f32.mrb[0].mxu0
        %v1139 = vpop.f32.mrb[0].mxu0
        %1140 = vdwg.mxu0
        %v1141 = vpack.c.bf16 %v1024, %v1024
        %v1142 = vpack.c.bf16 %v1078, %v1078
        %v1143 = vpack.c.bf16 %v1136, %v1136
        %v1144 = vlaneseq
        %v1145 = vshrl.u32 %v1144, 7
        %v1146 = vlaneseq
        %v1147 = vand.u32 %v1146, 127
        %vm1148 = vcmp.ge.s32.totalorder %v1145, %v1147
        %v1149 = vld [vmem:[%s863] sm:$0x1]
        %vm1150 = vcmp.gt.f32.partialorder %v1149, 0.5
        %v1151 = vsel %vm1150, 1, 0
        %v1152 = vlaneseq
        %v1153 = vshrl.u32 %v1152, 7
        %v1154 = vsub.s32 0, %v1153
        %v1155 = vrot.slane %v1151, %v1154
        %vm1156 = vcmp.eq.s32.totalorder %v1155, 1
        %vm1157 = vmand %vm1148, %vm1156
        %v1158 = vsel %vm1157, 0.0, -1e+09
        %1160 = vrot.lane.b32.xlu0 %v1141, 120
        %v1161 = vpop.permute.xlu0 %1160
        %1162 = vrot.lane.b32.xlu0 %v1141, 112
        %v1163 = vpop.permute.xlu0 %1162
        %1164 = vrot.lane.b32.xlu0 %v1141, 104
        %v1165 = vpop.permute.xlu0 %1164
        %v1167 = vunpack.c.l.s4 1983009808
        %v1168 = vunpack.c.0.s8 %v1167
        %v1169 = vlaneseq
        %v1170 = vshrl.u32 %v1169, 7
        %v1171 = vsub.s32 %v1168, %v1170
        %v1172 = vrot.slane %v1141, %v1171
        %v1175 = vunpack.c.l.s4 1983009808
        %v1176 = vunpack.c.0.s8 %v1175
        %v1177 = vlaneseq
        %v1178 = vshrl.u32 %v1177, 7
        %v1179 = vsub.s32 %v1176, %v1178
        %v1180 = vrot.slane %v1163, %v1179
        %v1181 = vcombine.low %v1172, %v1180
        %v1182 = vcombine.high %v1172, %v1180
        %v1184 = vunpack.c.l.s4 1934713408
        %v1185 = vunpack.c.0.s8 %v1184
        %v1186 = vlaneseq
        %v1187 = vshrl.u32 %v1186, 7
        %v1188 = vsub.s32 %v1185, %v1187
        %v1189 = vrot.slane %v1181, %v1188
        %v1191 = vunpack.c.l.s4 1934713408
        %v1192 = vunpack.c.0.s8 %v1191
        %v1193 = vlaneseq
        %v1194 = vshrl.u32 %v1193, 7
        %v1195 = vsub.s32 %v1192, %v1194
        %v1196 = vrot.slane %v1182, %v1195
        %v1197 = vcombine.high %v1189, 0
        %v1198 = vcombine.high %v1196, 0
        %v1201 = vunpack.c.l.s4 1983009808
        %v1202 = vunpack.c.0.s8 %v1201
        %v1203 = vlaneseq
        %v1204 = vshrl.u32 %v1203, 7
        %v1205 = vsub.s32 %v1202, %v1204
        %v1206 = vrot.slane %v1161, %v1205
        %v1209 = vunpack.c.l.s4 1983009808
        %v1210 = vunpack.c.0.s8 %v1209
        %v1211 = vlaneseq
        %v1212 = vshrl.u32 %v1211, 7
        %v1213 = vsub.s32 %v1210, %v1212
        %v1214 = vrot.slane %v1165, %v1213
        %v1215 = vcombine.low %v1206, %v1214
        %v1216 = vcombine.high %v1206, %v1214
        %v1218 = vunpack.c.l.s4 1934713408
        %v1219 = vunpack.c.0.s8 %v1218
        %v1220 = vlaneseq
        %v1221 = vshrl.u32 %v1220, 7
        %v1222 = vsub.s32 %v1219, %v1221
        %v1223 = vrot.slane %v1215, %v1222
        %v1225 = vunpack.c.l.s4 1934713408
        %v1226 = vunpack.c.0.s8 %v1225
        %v1227 = vlaneseq
        %v1228 = vshrl.u32 %v1227, 7
        %v1229 = vsub.s32 %v1226, %v1228
        %v1230 = vrot.slane %v1216, %v1229
        %v1231 = vcombine.high %v1223, 0
        %v1232 = vcombine.high %v1230, 0
        %v1235 = vpack.i.b16 %v1223, %v1189
        %v1237 = vshrl.u32 %v1189, 16
        %v1238 = vshrl.u32 %v1223, 16
        %v1239 = vpack.i.b16 %v1238, %v1237
        %v1243 = vpack.i.b16 %v1231, %v1197
        %v1245 = vshrl.u32 %v1197, 16
        %v1246 = vshrl.u32 %v1231, 16
        %v1247 = vpack.i.b16 %v1246, %v1245
        %v1251 = vpack.i.b16 %v1230, %v1196
        %v1253 = vshrl.u32 %v1196, 16
        %v1254 = vshrl.u32 %v1230, 16
        %v1255 = vpack.i.b16 %v1254, %v1253
        %v1259 = vpack.i.b16 %v1232, %v1198
        %v1261 = vshrl.u32 %v1198, 16
        %v1262 = vshrl.u32 %v1232, 16
        %v1263 = vpack.i.b16 %v1262, %v1261
        %v1265 = vcombine.low %v1235, %v1251
        %v1267 = vunpack.c.l.s4 1983009808
        %v1268 = vunpack.c.0.s8 %v1267
        %v1269 = vlaneseq
        %v1270 = vshrl.u32 %v1269, 7
        %v1271 = vsub.s32 %v1268, %v1270
        %v1272 = vrot.slane %v1265, %v1271
        %v1273 = vcombine.low %v1243, %v1259
        %v1275 = vunpack.c.l.s4 1983009808
        %v1276 = vunpack.c.0.s8 %v1275
        %v1277 = vlaneseq
        %v1278 = vshrl.u32 %v1277, 7
        %v1279 = vsub.s32 %v1276, %v1278
        %v1280 = vrot.slane %v1273, %v1279
        %v1281 = vcombine.low %v1272, %v1280
        %v1283 = vunpack.c.l.s4 1934713408
        %v1284 = vunpack.c.0.s8 %v1283
        %v1285 = vlaneseq
        %v1286 = vshrl.u32 %v1285, 7
        %v1287 = vsub.s32 %v1284, %v1286
        %v1288 = vrot.slane %v1281, %v1287
        %v1289 = vcombine.high %v1288, 0
        %v1290 = vcombine.low %v1239, %v1255
        %v1292 = vunpack.c.l.s4 1983009808
        %v1293 = vunpack.c.0.s8 %v1292
        %v1294 = vlaneseq
        %v1295 = vshrl.u32 %v1294, 7
        %v1296 = vsub.s32 %v1293, %v1295
        %v1297 = vrot.slane %v1290, %v1296
        %v1298 = vcombine.low %v1247, %v1263
        %v1300 = vunpack.c.l.s4 1983009808
        %v1301 = vunpack.c.0.s8 %v1300
        %v1302 = vlaneseq
        %v1303 = vshrl.u32 %v1302, 7
        %v1304 = vsub.s32 %v1301, %v1303
        %v1305 = vrot.slane %v1298, %v1304
        %v1306 = vcombine.low %v1297, %v1305
        %v1308 = vunpack.c.l.s4 1934713408
        %v1309 = vunpack.c.0.s8 %v1308
        %v1310 = vlaneseq
        %v1311 = vshrl.u32 %v1310, 7
        %v1312 = vsub.s32 %v1309, %v1311
        %v1313 = vrot.slane %v1306, %v1312
        %v1314 = vcombine.high %v1313, 0
        %v1317 = vpack.i.b16 %v1313, %v1288
        %v1318 = vshrl.u32 %v1288, 16
        %v1319 = vshrl.u32 %v1313, 16
        %v1320 = vpack.i.b16 %v1319, %v1318
        %v1323 = vpack.i.b16 %v1314, %v1289
        %v1324 = vshrl.u32 %v1289, 16
        %v1325 = vshrl.u32 %v1314, 16
        %v1326 = vpack.i.b16 %v1325, %v1324
        %1328 = vrot.lane.b32.xlu0 %v1142, 120
        %v1329 = vpop.permute.xlu0 %1328
        %1330 = vrot.lane.b32.xlu0 %v1142, 112
        %v1331 = vpop.permute.xlu0 %1330
        %1332 = vrot.lane.b32.xlu0 %v1142, 104
        %v1333 = vpop.permute.xlu0 %1332
        %v1335 = vunpack.c.l.s4 1983009808
        %v1336 = vunpack.c.0.s8 %v1335
        %v1337 = vlaneseq
        %v1338 = vshrl.u32 %v1337, 7
        %v1339 = vsub.s32 %v1336, %v1338
        %v1340 = vrot.slane %v1142, %v1339
        %v1343 = vunpack.c.l.s4 1983009808
        %v1344 = vunpack.c.0.s8 %v1343
        %v1345 = vlaneseq
        %v1346 = vshrl.u32 %v1345, 7
        %v1347 = vsub.s32 %v1344, %v1346
        %v1348 = vrot.slane %v1331, %v1347
        %v1349 = vcombine.low %v1340, %v1348
        %v1350 = vcombine.high %v1340, %v1348
        %v1352 = vunpack.c.l.s4 1934713408
        %v1353 = vunpack.c.0.s8 %v1352
        %v1354 = vlaneseq
        %v1355 = vshrl.u32 %v1354, 7
        %v1356 = vsub.s32 %v1353, %v1355
        %v1357 = vrot.slane %v1349, %v1356
        %v1359 = vunpack.c.l.s4 1934713408
        %v1360 = vunpack.c.0.s8 %v1359
        %v1361 = vlaneseq
        %v1362 = vshrl.u32 %v1361, 7
        %v1363 = vsub.s32 %v1360, %v1362
        %v1364 = vrot.slane %v1350, %v1363
        %v1365 = vcombine.high %v1357, 0
        %v1366 = vcombine.high %v1364, 0
        %v1369 = vunpack.c.l.s4 1983009808
        %v1370 = vunpack.c.0.s8 %v1369
        %v1371 = vlaneseq
        %v1372 = vshrl.u32 %v1371, 7
        %v1373 = vsub.s32 %v1370, %v1372
        %v1374 = vrot.slane %v1329, %v1373
        %v1377 = vunpack.c.l.s4 1983009808
        %v1378 = vunpack.c.0.s8 %v1377
        %v1379 = vlaneseq
        %v1380 = vshrl.u32 %v1379, 7
        %v1381 = vsub.s32 %v1378, %v1380
        %v1382 = vrot.slane %v1333, %v1381
        %v1383 = vcombine.low %v1374, %v1382
        %v1384 = vcombine.high %v1374, %v1382
        %v1386 = vunpack.c.l.s4 1934713408
        %v1387 = vunpack.c.0.s8 %v1386
        %v1388 = vlaneseq
        %v1389 = vshrl.u32 %v1388, 7
        %v1390 = vsub.s32 %v1387, %v1389
        %v1391 = vrot.slane %v1383, %v1390
        %v1393 = vunpack.c.l.s4 1934713408
        %v1394 = vunpack.c.0.s8 %v1393
        %v1395 = vlaneseq
        %v1396 = vshrl.u32 %v1395, 7
        %v1397 = vsub.s32 %v1394, %v1396
        %v1398 = vrot.slane %v1384, %v1397
        %v1399 = vcombine.high %v1391, 0
        %v1400 = vcombine.high %v1398, 0
        %v1403 = vpack.i.b16 %v1391, %v1357
        %v1405 = vshrl.u32 %v1357, 16
        %v1406 = vshrl.u32 %v1391, 16
        %v1407 = vpack.i.b16 %v1406, %v1405
        %v1411 = vpack.i.b16 %v1399, %v1365
        %v1413 = vshrl.u32 %v1365, 16
        %v1414 = vshrl.u32 %v1399, 16
        %v1415 = vpack.i.b16 %v1414, %v1413
        %v1419 = vpack.i.b16 %v1398, %v1364
        %v1421 = vshrl.u32 %v1364, 16
        %v1422 = vshrl.u32 %v1398, 16
        %v1423 = vpack.i.b16 %v1422, %v1421
        %v1427 = vpack.i.b16 %v1400, %v1366
        %v1429 = vshrl.u32 %v1366, 16
        %v1430 = vshrl.u32 %v1400, 16
        %v1431 = vpack.i.b16 %v1430, %v1429
        %v1433 = vcombine.low %v1403, %v1419
        %v1435 = vunpack.c.l.s4 1983009808
        %v1436 = vunpack.c.0.s8 %v1435
        %v1437 = vlaneseq
        %v1438 = vshrl.u32 %v1437, 7
        %v1439 = vsub.s32 %v1436, %v1438
        %v1440 = vrot.slane %v1433, %v1439
        %v1441 = vcombine.low %v1411, %v1427
        %v1443 = vunpack.c.l.s4 1983009808
        %v1444 = vunpack.c.0.s8 %v1443
        %v1445 = vlaneseq
        %v1446 = vshrl.u32 %v1445, 7
        %v1447 = vsub.s32 %v1444, %v1446
        %v1448 = vrot.slane %v1441, %v1447
        %v1449 = vcombine.low %v1440, %v1448
        %v1451 = vunpack.c.l.s4 1934713408
        %v1452 = vunpack.c.0.s8 %v1451
        %v1453 = vlaneseq
        %v1454 = vshrl.u32 %v1453, 7
        %v1455 = vsub.s32 %v1452, %v1454
        %v1456 = vrot.slane %v1449, %v1455
        %v1457 = vcombine.high %v1456, 0
        %v1458 = vcombine.low %v1407, %v1423
        %v1460 = vunpack.c.l.s4 1983009808
        %v1461 = vunpack.c.0.s8 %v1460
        %v1462 = vlaneseq
        %v1463 = vshrl.u32 %v1462, 7
        %v1464 = vsub.s32 %v1461, %v1463
        %v1465 = vrot.slane %v1458, %v1464
        %v1466 = vcombine.low %v1415, %v1431
        %v1468 = vunpack.c.l.s4 1983009808
        %v1469 = vunpack.c.0.s8 %v1468
        %v1470 = vlaneseq
        %v1471 = vshrl.u32 %v1470, 7
        %v1472 = vsub.s32 %v1469, %v1471
        %v1473 = vrot.slane %v1466, %v1472
        %v1474 = vcombine.low %v1465, %v1473
        %v1476 = vunpack.c.l.s4 1934713408
        %v1477 = vunpack.c.0.s8 %v1476
        %v1478 = vlaneseq
        %v1479 = vshrl.u32 %v1478, 7
        %v1480 = vsub.s32 %v1477, %v1479
        %v1481 = vrot.slane %v1474, %v1480
        %v1482 = vcombine.high %v1481, 0
        %v1485 = vpack.i.b16 %v1481, %v1456
        %v1486 = vshrl.u32 %v1456, 16
        %v1487 = vshrl.u32 %v1481, 16
        %v1488 = vpack.i.b16 %v1487, %v1486
        %v1491 = vpack.i.b16 %v1482, %v1457
        %v1492 = vshrl.u32 %v1457, 16
        %v1493 = vshrl.u32 %v1482, 16
        %v1494 = vpack.i.b16 %v1493, %v1492
        %1496 = vrot.lane.b32.xlu0 %v1143, 120
        %v1497 = vpop.permute.xlu0 %1496
        %1498 = vrot.lane.b32.xlu0 %v1143, 112
        %v1499 = vpop.permute.xlu0 %1498
        %1500 = vrot.lane.b32.xlu0 %v1143, 104
        %v1501 = vpop.permute.xlu0 %1500
        %v1503 = vunpack.c.l.s4 1983009808
        %v1504 = vunpack.c.0.s8 %v1503
        %v1505 = vlaneseq
        %v1506 = vshrl.u32 %v1505, 7
        %v1507 = vsub.s32 %v1504, %v1506
        %v1508 = vrot.slane %v1143, %v1507
        %v1511 = vunpack.c.l.s4 1983009808
        %v1512 = vunpack.c.0.s8 %v1511
        %v1513 = vlaneseq
        %v1514 = vshrl.u32 %v1513, 7
        %v1515 = vsub.s32 %v1512, %v1514
        %v1516 = vrot.slane %v1499, %v1515
        %v1517 = vcombine.low %v1508, %v1516
        %v1518 = vcombine.high %v1508, %v1516
        %v1520 = vunpack.c.l.s4 1934713408
        %v1521 = vunpack.c.0.s8 %v1520
        %v1522 = vlaneseq
        %v1523 = vshrl.u32 %v1522, 7
        %v1524 = vsub.s32 %v1521, %v1523
        %v1525 = vrot.slane %v1517, %v1524
        %v1527 = vunpack.c.l.s4 1934713408
        %v1528 = vunpack.c.0.s8 %v1527
        %v1529 = vlaneseq
        %v1530 = vshrl.u32 %v1529, 7
        %v1531 = vsub.s32 %v1528, %v1530
        %v1532 = vrot.slane %v1518, %v1531
        %v1533 = vcombine.high %v1525, 0
        %v1534 = vcombine.high %v1532, 0
        %v1537 = vunpack.c.l.s4 1983009808
        %v1538 = vunpack.c.0.s8 %v1537
        %v1539 = vlaneseq
        %v1540 = vshrl.u32 %v1539, 7
        %v1541 = vsub.s32 %v1538, %v1540
        %v1542 = vrot.slane %v1497, %v1541
        %v1545 = vunpack.c.l.s4 1983009808
        %v1546 = vunpack.c.0.s8 %v1545
        %v1547 = vlaneseq
        %v1548 = vshrl.u32 %v1547, 7
        %v1549 = vsub.s32 %v1546, %v1548
        %v1550 = vrot.slane %v1501, %v1549
        %v1551 = vcombine.low %v1542, %v1550
        %v1552 = vcombine.high %v1542, %v1550
        %v1554 = vunpack.c.l.s4 1934713408
        %v1555 = vunpack.c.0.s8 %v1554
        %v1556 = vlaneseq
        %v1557 = vshrl.u32 %v1556, 7
        %v1558 = vsub.s32 %v1555, %v1557
        %v1559 = vrot.slane %v1551, %v1558
        %v1561 = vunpack.c.l.s4 1934713408
        %v1562 = vunpack.c.0.s8 %v1561
        %v1563 = vlaneseq
        %v1564 = vshrl.u32 %v1563, 7
        %v1565 = vsub.s32 %v1562, %v1564
        %v1566 = vrot.slane %v1552, %v1565
        %v1567 = vcombine.high %v1559, 0
        %v1568 = vcombine.high %v1566, 0
        %v1571 = vpack.i.b16 %v1559, %v1525
        %v1573 = vshrl.u32 %v1525, 16
        %v1574 = vshrl.u32 %v1559, 16
        %v1575 = vpack.i.b16 %v1574, %v1573
        %v1579 = vpack.i.b16 %v1567, %v1533
        %v1581 = vshrl.u32 %v1533, 16
        %v1582 = vshrl.u32 %v1567, 16
        %v1583 = vpack.i.b16 %v1582, %v1581
        %v1587 = vpack.i.b16 %v1566, %v1532
        %v1589 = vshrl.u32 %v1532, 16
        %v1590 = vshrl.u32 %v1566, 16
        %v1591 = vpack.i.b16 %v1590, %v1589
        %v1595 = vpack.i.b16 %v1568, %v1534
        %v1597 = vshrl.u32 %v1534, 16
        %v1598 = vshrl.u32 %v1568, 16
        %v1599 = vpack.i.b16 %v1598, %v1597
        %v1601 = vcombine.low %v1571, %v1587
        %v1603 = vunpack.c.l.s4 1983009808
        %v1604 = vunpack.c.0.s8 %v1603
        %v1605 = vlaneseq
        %v1606 = vshrl.u32 %v1605, 7
        %v1607 = vsub.s32 %v1604, %v1606
        %v1608 = vrot.slane %v1601, %v1607
        %v1609 = vcombine.low %v1579, %v1595
        %v1611 = vunpack.c.l.s4 1983009808
        %v1612 = vunpack.c.0.s8 %v1611
        %v1613 = vlaneseq
        %v1614 = vshrl.u32 %v1613, 7
        %v1615 = vsub.s32 %v1612, %v1614
        %v1616 = vrot.slane %v1609, %v1615
        %v1617 = vcombine.low %v1608, %v1616
        %v1619 = vunpack.c.l.s4 1934713408
        %v1620 = vunpack.c.0.s8 %v1619
        %v1621 = vlaneseq
        %v1622 = vshrl.u32 %v1621, 7
        %v1623 = vsub.s32 %v1620, %v1622
        %v1624 = vrot.slane %v1617, %v1623
        %v1625 = vcombine.high %v1624, 0
        %v1626 = vcombine.low %v1575, %v1591
        %v1628 = vunpack.c.l.s4 1983009808
        %v1629 = vunpack.c.0.s8 %v1628
        %v1630 = vlaneseq
        %v1631 = vshrl.u32 %v1630, 7
        %v1632 = vsub.s32 %v1629, %v1631
        %v1633 = vrot.slane %v1626, %v1632
        %v1634 = vcombine.low %v1583, %v1599
        %v1636 = vunpack.c.l.s4 1983009808
        %v1637 = vunpack.c.0.s8 %v1636
        %v1638 = vlaneseq
        %v1639 = vshrl.u32 %v1638, 7
        %v1640 = vsub.s32 %v1637, %v1639
        %v1641 = vrot.slane %v1634, %v1640
        %v1642 = vcombine.low %v1633, %v1641
        %v1644 = vunpack.c.l.s4 1934713408
        %v1645 = vunpack.c.0.s8 %v1644
        %v1646 = vlaneseq
        %v1647 = vshrl.u32 %v1646, 7
        %v1648 = vsub.s32 %v1645, %v1647
        %v1649 = vrot.slane %v1642, %v1648
        %v1650 = vcombine.high %v1649, 0
        %v1653 = vpack.i.b16 %v1649, %v1624
        %v1654 = vshrl.u32 %v1624, 16
        %v1655 = vshrl.u32 %v1649, 16
        %v1656 = vpack.i.b16 %v1655, %v1654
        %v1659 = vpack.i.b16 %v1650, %v1625
        %v1660 = vshrl.u32 %v1625, 16
        %v1661 = vshrl.u32 %v1650, 16
        %v1662 = vpack.i.b16 %v1661, %v1660
        %vm1663 = vcmask 64512
        %v1665 = vsel %vm1663, %v1317, 0
        %v1668 = vsel %vm1663, %v1485, 0
        %1670 = vmatprep.subr.bf16.mxu0 0
        %1671 = vmatpush1.bf16.xpose.msra.mxu0 %v1668
        %1672 = vmatprep.subr.bf16.mxu0 0
        %1673 = vmatpush1.bf16.xpose.msra.mxu0 0
        %1674 = vmatprep.subr.bf16.mxu0 0
        %1675 = vmatpush1.bf16.xpose.msra.mxu0 0
        %1676 = vmatprep.subr.bf16.mxu0 0
        %1677 = vmatpush1.bf16.xpose.msra.mxu0 0
        %1678 = vmatprep.subr.bf16.mxu0 0
        %1679 = vmatpush1.bf16.xpose.msra.mxu0 0
        %1680 = vmatprep.subr.bf16.mxu0 0
        %1681 = vmatpush1.bf16.xpose.msra.mxu0 0
        %1682 = vmatprep.subr.bf16.mxu0 0
        %1683 = vmatpush1.bf16.xpose.msra.mxu0 0
        %1684 = vmatprep.subr.bf16.mxu0 0
        %1685 = vmatpush1.bf16.xpose.msra.mxu0 0
        %1686 = vmatprep.subr.bf16.mxu0 0
        %1687 = vmatpush1.bf16.xpose.msra.mxu0 0
        %1688 = vmatprep.subr.bf16.mxu0 0
        %1689 = vmatpush1.bf16.xpose.msra.mxu0 0
        %1690 = vmatprep.subr.bf16.mxu0 0
        %1691 = vmatpush1.bf16.xpose.msra.mxu0 0
        %1692 = vmatprep.subr.bf16.mxu0 0
        %1693 = vmatpush1.bf16.xpose.msra.mxu0 0
        %1694 = vmatprep.subr.bf16.mxu0 0
        %1695 = vmatpush1.bf16.xpose.msra.mxu0 0
        %1696 = vmatprep.subr.bf16.mxu0 0
        %1697 = vmatpush1.bf16.xpose.msra.mxu0 0
        %1698 = vmatprep.subr.bf16.mxu0 0
        %1699 = vmatpush1.bf16.xpose.msra.mxu0 0
        %1700 = vmatprep.subr.bf16.mxu0 0
        %1701 = vmatpush1.bf16.xpose.msra.mxu0 0
        %1702 = vmatprep.mubr.bf16.mxu0 0
        %1703 = vmatmul.mubr.bf16.gmra.mrb[0].mxu0 %v1665
        %v1704 = vpop.f32.mrb[0].mxu0
        %v1705 = vadd.f32 %v1158, %v1704
        %v1706 = vpop.f32.mrb[0].mxu0
        %v1707 = vpop.f32.mrb[0].mxu0
        %v1708 = vpop.f32.mrb[0].mxu0
        %1709 = vdwg.mxu0
        %v1711 = vsel %vm1663, %v1320, 0
        %v1714 = vsel %vm1663, %v1488, 0
        %1716 = vmatprep.subr.bf16.mxu0 0
        %1717 = vmatpush1.bf16.xpose.msra.mxu0 %v1714
        %1718 = vmatprep.subr.bf16.mxu0 0
        %1719 = vmatpush1.bf16.xpose.msra.mxu0 0
        %1720 = vmatprep.subr.bf16.mxu0 0
        %1721 = vmatpush1.bf16.xpose.msra.mxu0 0
        %1722 = vmatprep.subr.bf16.mxu0 0
        %1723 = vmatpush1.bf16.xpose.msra.mxu0 0
        %1724 = vmatprep.subr.bf16.mxu0 0
        %1725 = vmatpush1.bf16.xpose.msra.mxu0 0
        %1726 = vmatprep.subr.bf16.mxu0 0
        %1727 = vmatpush1.bf16.xpose.msra.mxu0 0
        %1728 = vmatprep.subr.bf16.mxu0 0
        %1729 = vmatpush1.bf16.xpose.msra.mxu0 0
        %1730 = vmatprep.subr.bf16.mxu0 0
        %1731 = vmatpush1.bf16.xpose.msra.mxu0 0
        %1732 = vmatprep.subr.bf16.mxu0 0
        %1733 = vmatpush1.bf16.xpose.msra.mxu0 0
        %1734 = vmatprep.subr.bf16.mxu0 0
        %1735 = vmatpush1.bf16.xpose.msra.mxu0 0
        %1736 = vmatprep.subr.bf16.mxu0 0
        %1737 = vmatpush1.bf16.xpose.msra.mxu0 0
        %1738 = vmatprep.subr.bf16.mxu0 0
        %1739 = vmatpush1.bf16.xpose.msra.mxu0 0
        %1740 = vmatprep.subr.bf16.mxu0 0
        %1741 = vmatpush1.bf16.xpose.msra.mxu0 0
        %1742 = vmatprep.subr.bf16.mxu0 0
        %1743 = vmatpush1.bf16.xpose.msra.mxu0 0
        %1744 = vmatprep.subr.bf16.mxu0 0
        %1745 = vmatpush1.bf16.xpose.msra.mxu0 0
        %1746 = vmatprep.subr.bf16.mxu0 0
        %1747 = vmatpush1.bf16.xpose.msra.mxu0 0
        %1748 = vmatprep.mubr.bf16.mxu0 0
        %1749 = vmatmul.mubr.bf16.gmra.mrb[0].mxu0 %v1711
        %v1750 = vpop.f32.mrb[0].mxu0
        %v1751 = vadd.f32 %v1158, %v1750
        %v1752 = vpop.f32.mrb[0].mxu0
        %v1753 = vpop.f32.mrb[0].mxu0
        %v1754 = vpop.f32.mrb[0].mxu0
        %1755 = vdwg.mxu0
        %v1757 = vsel %vm1663, %v1323, 0
        %v1760 = vsel %vm1663, %v1491, 0
        %1762 = vmatprep.subr.bf16.mxu0 0
        %1763 = vmatpush1.bf16.xpose.msra.mxu0 %v1760
        %1764 = vmatprep.subr.bf16.mxu0 0
        %1765 = vmatpush1.bf16.xpose.msra.mxu0 0
        %1766 = vmatprep.subr.bf16.mxu0 0
        %1767 = vmatpush1.bf16.xpose.msra.mxu0 0
        %1768 = vmatprep.subr.bf16.mxu0 0
        %1769 = vmatpush1.bf16.xpose.msra.mxu0 0
        %1770 = vmatprep.subr.bf16.mxu0 0
        %1771 = vmatpush1.bf16.xpose.msra.mxu0 0
        %1772 = vmatprep.subr.bf16.mxu0 0
        %1773 = vmatpush1.bf16.xpose.msra.mxu0 0
        %1774 = vmatprep.subr.bf16.mxu0 0
        %1775 = vmatpush1.bf16.xpose.msra.mxu0 0
        %1776 = vmatprep.subr.bf16.mxu0 0
        %1777 = vmatpush1.bf16.xpose.msra.mxu0 0
        %1778 = vmatprep.subr.bf16.mxu0 0
        %1779 = vmatpush1.bf16.xpose.msra.mxu0 0
        %1780 = vmatprep.subr.bf16.mxu0 0
        %1781 = vmatpush1.bf16.xpose.msra.mxu0 0
        %1782 = vmatprep.subr.bf16.mxu0 0
        %1783 = vmatpush1.bf16.xpose.msra.mxu0 0
        %1784 = vmatprep.subr.bf16.mxu0 0
        %1785 = vmatpush1.bf16.xpose.msra.mxu0 0
        %1786 = vmatprep.subr.bf16.mxu0 0
        %1787 = vmatpush1.bf16.xpose.msra.mxu0 0
        %1788 = vmatprep.subr.bf16.mxu0 0
        %1789 = vmatpush1.bf16.xpose.msra.mxu0 0
        %1790 = vmatprep.subr.bf16.mxu0 0
        %1791 = vmatpush1.bf16.xpose.msra.mxu0 0
        %1792 = vmatprep.subr.bf16.mxu0 0
        %1793 = vmatpush1.bf16.xpose.msra.mxu0 0
        %1794 = vmatprep.mubr.bf16.mxu0 0
        %1795 = vmatmul.mubr.bf16.gmra.mrb[0].mxu0 %v1757
        %v1796 = vpop.f32.mrb[0].mxu0
        %v1797 = vadd.f32 %v1158, %v1796
        %v1798 = vpop.f32.mrb[0].mxu0
        %v1799 = vpop.f32.mrb[0].mxu0
        %v1800 = vpop.f32.mrb[0].mxu0
        %1801 = vdwg.mxu0
        %v1803 = vsel %vm1663, %v1326, 0
        %v1806 = vsel %vm1663, %v1494, 0
        %1808 = vmatprep.subr.bf16.mxu0 0
        %1809 = vmatpush1.bf16.xpose.msra.mxu0 %v1806
        %1810 = vmatprep.subr.bf16.mxu0 0
        %1811 = vmatpush1.bf16.xpose.msra.mxu0 0
        %1812 = vmatprep.subr.bf16.mxu0 0
        %1813 = vmatpush1.bf16.xpose.msra.mxu0 0
        %1814 = vmatprep.subr.bf16.mxu0 0
        %1815 = vmatpush1.bf16.xpose.msra.mxu0 0
        %1816 = vmatprep.subr.bf16.mxu0 0
        %1817 = vmatpush1.bf16.xpose.msra.mxu0 0
        %1818 = vmatprep.subr.bf16.mxu0 0
        %1819 = vmatpush1.bf16.xpose.msra.mxu0 0
        %1820 = vmatprep.subr.bf16.mxu0 0
        %1821 = vmatpush1.bf16.xpose.msra.mxu0 0
        %1822 = vmatprep.subr.bf16.mxu0 0
        %1823 = vmatpush1.bf16.xpose.msra.mxu0 0
        %1824 = vmatprep.subr.bf16.mxu0 0
        %1825 = vmatpush1.bf16.xpose.msra.mxu0 0
        %1826 = vmatprep.subr.bf16.mxu0 0
        %1827 = vmatpush1.bf16.xpose.msra.mxu0 0
        %1828 = vmatprep.subr.bf16.mxu0 0
        %1829 = vmatpush1.bf16.xpose.msra.mxu0 0
        %1830 = vmatprep.subr.bf16.mxu0 0
        %1831 = vmatpush1.bf16.xpose.msra.mxu0 0
        %1832 = vmatprep.subr.bf16.mxu0 0
        %1833 = vmatpush1.bf16.xpose.msra.mxu0 0
        %1834 = vmatprep.subr.bf16.mxu0 0
        %1835 = vmatpush1.bf16.xpose.msra.mxu0 0
        %1836 = vmatprep.subr.bf16.mxu0 0
        %1837 = vmatpush1.bf16.xpose.msra.mxu0 0
        %1838 = vmatprep.subr.bf16.mxu0 0
        %1839 = vmatpush1.bf16.xpose.msra.mxu0 0
        %1840 = vmatprep.mubr.bf16.mxu0 0
        %1841 = vmatmul.mubr.bf16.gmra.mrb[0].mxu0 %v1803
        %v1842 = vpop.f32.mrb[0].mxu0
        %v1843 = vadd.f32 %v1158, %v1842
        %v1844 = vpop.f32.mrb[0].mxu0
        %v1845 = vpop.f32.mrb[0].mxu0
        %v1846 = vpop.f32.mrb[0].mxu0
        %1847 = vdwg.mxu0
        %v1848 = vsel %vm1663, %v1705, -inf
        %1849 = vmax.xlane.f32.xlu0 %v1848
        %v1850 = vpop.xlane.xlu0 %1849
        %v1851 = vsel %vm1663, %v1751, -inf
        %1852 = vmax.xlane.f32.xlu0 %v1851
        %v1853 = vpop.xlane.xlu0 %1852
        %v1854 = vsel %vm1663, %v1797, -inf
        %1855 = vmax.xlane.f32.xlu0 %v1854
        %v1856 = vpop.xlane.xlu0 %1855
        %v1857 = vsel %vm1663, %v1843, -inf
        %1858 = vmax.xlane.f32.xlu0 %v1857
        %v1859 = vpop.xlane.xlu0 %1858
        %v1860 = vsub.f32 %v1705, %v1850
        %v1861 = vsub.f32 %v1751, %v1853
        %v1862 = vsub.f32 %v1797, %v1856
        %v1863 = vsub.f32 %v1843, %v1859
        %v1864 = vmul.f32 %v1860, 1.442695
        %v1865 = vpow.pop %v1864
        %v1866 = vmul.f32 %v1861, 1.442695
        %v1867 = vpow.pop %v1866
        %v1868 = vmul.f32 %v1862, 1.442695
        %v1869 = vpow.pop %v1868
        %v1870 = vmul.f32 %v1863, 1.442695
        %v1871 = vpow.pop %v1870
        %v1872 = vsel %vm1663, %v1865, 0.0
        %1873 = vadd.xlane.f32.xlu0 %v1872
        %v1874 = vpop.xlane.xlu0 %1873
        %v1875 = vsel %vm1663, %v1867, 0.0
        %1876 = vadd.xlane.f32.xlu0 %v1875
        %v1877 = vpop.xlane.xlu0 %1876
        %v1878 = vsel %vm1663, %v1869, 0.0
        %1879 = vadd.xlane.f32.xlu0 %v1878
        %v1880 = vpop.xlane.xlu0 %1879
        %v1881 = vsel %vm1663, %v1871, 0.0
        %1882 = vadd.xlane.f32.xlu0 %v1881
        %v1883 = vpop.xlane.xlu0 %1882
        %v1884 = vrcp.pop %v1874
        %v1885 = vrcp.pop %v1877
        %v1886 = vrcp.pop %v1880
        %v1887 = vrcp.pop %v1883
        %v1888 = vmul.f32 %v1865, %v1884
        %v1889 = vmul.f32 %v1867, %v1885
        %v1890 = vmul.f32 %v1869, %v1886
        %v1891 = vmul.f32 %v1871, %v1887
        %v1892 = vpack.c.bf16 %v1888, %v1888
        %v1893 = vpack.c.bf16 %v1889, %v1889
        %v1894 = vpack.c.bf16 %v1890, %v1890
        %v1895 = vpack.c.bf16 %v1891, %v1891
        %v1897 = vsel %vm1663, %v1892, 0
        %vm1899 = vcmask 1043456
        %v1901 = vsel %vm1899, %v1653, 0
        %1903 = vmatprep.subr.bf16.mxu0 0
        %1904 = vmatpush1.bf16.msra.mxu0 %v1901
        %1905 = vmatprep.subr.bf16.mxu0 0
        %1906 = vmatpush1.bf16.msra.mxu0 0
        %1907 = vmatprep.subr.bf16.mxu0 0
        %1908 = vmatpush1.bf16.msra.mxu0 0
        %1909 = vmatprep.subr.bf16.mxu0 0
        %1910 = vmatpush1.bf16.msra.mxu0 0
        %1911 = vmatprep.subr.bf16.mxu0 0
        %1912 = vmatpush1.bf16.msra.mxu0 0
        %1913 = vmatprep.subr.bf16.mxu0 0
        %1914 = vmatpush1.bf16.msra.mxu0 0
        %1915 = vmatprep.subr.bf16.mxu0 0
        %1916 = vmatpush1.bf16.msra.mxu0 0
        %1917 = vmatprep.subr.bf16.mxu0 0
        %1918 = vmatpush1.bf16.msra.mxu0 0
        %1919 = vmatprep.subr.bf16.mxu0 0
        %1920 = vmatpush1.bf16.msra.mxu0 0
        %1921 = vmatprep.subr.bf16.mxu0 0
        %1922 = vmatpush1.bf16.msra.mxu0 0
        %1923 = vmatprep.subr.bf16.mxu0 0
        %1924 = vmatpush1.bf16.msra.mxu0 0
        %1925 = vmatprep.subr.bf16.mxu0 0
        %1926 = vmatpush1.bf16.msra.mxu0 0
        %1927 = vmatprep.subr.bf16.mxu0 0
        %1928 = vmatpush1.bf16.msra.mxu0 0
        %1929 = vmatprep.subr.bf16.mxu0 0
        %1930 = vmatpush1.bf16.msra.mxu0 0
        %1931 = vmatprep.subr.bf16.mxu0 0
        %1932 = vmatpush1.bf16.msra.mxu0 0
        %1933 = vmatprep.subr.bf16.mxu0 0
        %1934 = vmatpush1.bf16.msra.mxu0 0
        %1935 = vmatprep.mubr.bf16.mxu0 0
        %1936 = vmatmul.mubr.bf16.gmra.mrb[0].mxu0 %v1897
        %v1937 = vpop.f32.mrb[0].mxu0
        %v1938 = vadd.f32 0.0, %v1937
        %v1939 = vpop.f32.mrb[0].mxu0
        %v1940 = vpop.f32.mrb[0].mxu0
        %v1941 = vpop.f32.mrb[0].mxu0
        %1942 = vdwg.mxu0
        %v1944 = vsel %vm1663, %v1893, 0
        %v1947 = vsel %vm1899, %v1656, 0
        %1949 = vmatprep.subr.bf16.mxu0 0
        %1950 = vmatpush1.bf16.msra.mxu0 %v1947
        %1951 = vmatprep.subr.bf16.mxu0 0
        %1952 = vmatpush1.bf16.msra.mxu0 0
        %1953 = vmatprep.subr.bf16.mxu0 0
        %1954 = vmatpush1.bf16.msra.mxu0 0
        %1955 = vmatprep.subr.bf16.mxu0 0
        %1956 = vmatpush1.bf16.msra.mxu0 0
        %1957 = vmatprep.subr.bf16.mxu0 0
        %1958 = vmatpush1.bf16.msra.mxu0 0
        %1959 = vmatprep.subr.bf16.mxu0 0
        %1960 = vmatpush1.bf16.msra.mxu0 0
        %1961 = vmatprep.subr.bf16.mxu0 0
        %1962 = vmatpush1.bf16.msra.mxu0 0
        %1963 = vmatprep.subr.bf16.mxu0 0
        %1964 = vmatpush1.bf16.msra.mxu0 0
        %1965 = vmatprep.subr.bf16.mxu0 0
        %1966 = vmatpush1.bf16.msra.mxu0 0
        %1967 = vmatprep.subr.bf16.mxu0 0
        %1968 = vmatpush1.bf16.msra.mxu0 0
        %1969 = vmatprep.subr.bf16.mxu0 0
        %1970 = vmatpush1.bf16.msra.mxu0 0
        %1971 = vmatprep.subr.bf16.mxu0 0
        %1972 = vmatpush1.bf16.msra.mxu0 0
        %1973 = vmatprep.subr.bf16.mxu0 0
        %1974 = vmatpush1.bf16.msra.mxu0 0
        %1975 = vmatprep.subr.bf16.mxu0 0
        %1976 = vmatpush1.bf16.msra.mxu0 0
        %1977 = vmatprep.subr.bf16.mxu0 0
        %1978 = vmatpush1.bf16.msra.mxu0 0
        %1979 = vmatprep.subr.bf16.mxu0 0
        %1980 = vmatpush1.bf16.msra.mxu0 0
        %1981 = vmatprep.mubr.bf16.mxu0 0
        %1982 = vmatmul.mubr.bf16.gmra.mrb[0].mxu0 %v1944
        %v1983 = vpop.f32.mrb[0].mxu0
        %v1984 = vadd.f32 0.0, %v1983
        %v1985 = vpop.f32.mrb[0].mxu0
        %v1986 = vpop.f32.mrb[0].mxu0
        %v1987 = vpop.f32.mrb[0].mxu0
        %1988 = vdwg.mxu0
        %v1990 = vsel %vm1663, %v1894, 0
        %v1993 = vsel %vm1899, %v1659, 0
        %1995 = vmatprep.subr.bf16.mxu0 0
        %1996 = vmatpush1.bf16.msra.mxu0 %v1993
        %1997 = vmatprep.subr.bf16.mxu0 0
        %1998 = vmatpush1.bf16.msra.mxu0 0
        %1999 = vmatprep.subr.bf16.mxu0 0
        %2000 = vmatpush1.bf16.msra.mxu0 0
        %2001 = vmatprep.subr.bf16.mxu0 0
        %2002 = vmatpush1.bf16.msra.mxu0 0
        %2003 = vmatprep.subr.bf16.mxu0 0
        %2004 = vmatpush1.bf16.msra.mxu0 0
        %2005 = vmatprep.subr.bf16.mxu0 0
        %2006 = vmatpush1.bf16.msra.mxu0 0
        %2007 = vmatprep.subr.bf16.mxu0 0
        %2008 = vmatpush1.bf16.msra.mxu0 0
        %2009 = vmatprep.subr.bf16.mxu0 0
        %2010 = vmatpush1.bf16.msra.mxu0 0
        %2011 = vmatprep.subr.bf16.mxu0 0
        %2012 = vmatpush1.bf16.msra.mxu0 0
        %2013 = vmatprep.subr.bf16.mxu0 0
        %2014 = vmatpush1.bf16.msra.mxu0 0
        %2015 = vmatprep.subr.bf16.mxu0 0
        %2016 = vmatpush1.bf16.msra.mxu0 0
        %2017 = vmatprep.subr.bf16.mxu0 0
        %2018 = vmatpush1.bf16.msra.mxu0 0
        %2019 = vmatprep.subr.bf16.mxu0 0
        %2020 = vmatpush1.bf16.msra.mxu0 0
        %2021 = vmatprep.subr.bf16.mxu0 0
        %2022 = vmatpush1.bf16.msra.mxu0 0
        %2023 = vmatprep.subr.bf16.mxu0 0
        %2024 = vmatpush1.bf16.msra.mxu0 0
        %2025 = vmatprep.subr.bf16.mxu0 0
        %2026 = vmatpush1.bf16.msra.mxu0 0
        %2027 = vmatprep.mubr.bf16.mxu0 0
        %2028 = vmatmul.mubr.bf16.gmra.mrb[0].mxu0 %v1990
        %v2029 = vpop.f32.mrb[0].mxu0
        %v2030 = vadd.f32 0.0, %v2029
        %v2031 = vpop.f32.mrb[0].mxu0
        %v2032 = vpop.f32.mrb[0].mxu0
        %v2033 = vpop.f32.mrb[0].mxu0
        %2034 = vdwg.mxu0
        %v2036 = vsel %vm1663, %v1895, 0
        %v2039 = vsel %vm1899, %v1662, 0
        %2041 = vmatprep.subr.bf16.mxu0 0
        %2042 = vmatpush1.bf16.msra.mxu0 %v2039
        %2043 = vmatprep.subr.bf16.mxu0 0
        %2044 = vmatpush1.bf16.msra.mxu0 0
        %2045 = vmatprep.subr.bf16.mxu0 0
        %2046 = vmatpush1.bf16.msra.mxu0 0
        %2047 = vmatprep.subr.bf16.mxu0 0
        %2048 = vmatpush1.bf16.msra.mxu0 0
        %2049 = vmatprep.subr.bf16.mxu0 0
        %2050 = vmatpush1.bf16.msra.mxu0 0
        %2051 = vmatprep.subr.bf16.mxu0 0
        %2052 = vmatpush1.bf16.msra.mxu0 0
        %2053 = vmatprep.subr.bf16.mxu0 0
        %2054 = vmatpush1.bf16.msra.mxu0 0
        %2055 = vmatprep.subr.bf16.mxu0 0
        %2056 = vmatpush1.bf16.msra.mxu0 0
        %2057 = vmatprep.subr.bf16.mxu0 0
        %2058 = vmatpush1.bf16.msra.mxu0 0
        %2059 = vmatprep.subr.bf16.mxu0 0
        %2060 = vmatpush1.bf16.msra.mxu0 0
        %2061 = vmatprep.subr.bf16.mxu0 0
        %2062 = vmatpush1.bf16.msra.mxu0 0
        %2063 = vmatprep.subr.bf16.mxu0 0
        %2064 = vmatpush1.bf16.msra.mxu0 0
        %2065 = vmatprep.subr.bf16.mxu0 0
        %2066 = vmatpush1.bf16.msra.mxu0 0
        %2067 = vmatprep.subr.bf16.mxu0 0
        %2068 = vmatpush1.bf16.msra.mxu0 0
        %2069 = vmatprep.subr.bf16.mxu0 0
        %2070 = vmatpush1.bf16.msra.mxu0 0
        %2071 = vmatprep.subr.bf16.mxu0 0
        %2072 = vmatpush1.bf16.msra.mxu0 0
        %2073 = vmatprep.mubr.bf16.mxu0 0
        %2074 = vmatmul.mubr.bf16.gmra.mrb[0].mxu0 %v2036
        %v2075 = vpop.f32.mrb[0].mxu0
        %v2076 = vadd.f32 0.0, %v2075
        %v2077 = vpop.f32.mrb[0].mxu0
        %v2078 = vpop.f32.mrb[0].mxu0
        %v2079 = vpop.f32.mrb[0].mxu0
        %2080 = vdwg.mxu0
        %v2081 = vpack.c.bf16 %v1938, %v1938
        %v2083 = vunpack.c.l.s4 1983009808
        %v2084 = vunpack.c.0.s8 %v2083
        %v2085 = vlaneseq
        %v2086 = vshrl.u32 %v2085, 7
        %v2087 = vsub.s32 %v2084, %v2086
        %v2088 = vrot.slane %v2081, %v2087
        %v2089 = vpack.c.bf16 %v2030, %v2030
        %v2091 = vunpack.c.l.s4 1983009808
        %v2092 = vunpack.c.0.s8 %v2091
        %v2093 = vlaneseq
        %v2094 = vshrl.u32 %v2093, 7
        %v2095 = vsub.s32 %v2092, %v2094
        %v2096 = vrot.slane %v2089, %v2095
        %v2097 = vcombine.low %v2088, %v2096
        %v2098 = vcombine.high %v2088, %v2096
        %v2100 = vunpack.c.l.s4 1934713408
        %v2101 = vunpack.c.0.s8 %v2100
        %v2102 = vlaneseq
        %v2103 = vshrl.u32 %v2102, 7
        %v2104 = vsub.s32 %v2101, %v2103
        %v2105 = vrot.slane %v2097, %v2104
        %v2107 = vunpack.c.l.s4 1934713408
        %v2108 = vunpack.c.0.s8 %v2107
        %v2109 = vlaneseq
        %v2110 = vshrl.u32 %v2109, 7
        %v2111 = vsub.s32 %v2108, %v2110
        %v2112 = vrot.slane %v2098, %v2111
        %v2113 = vcombine.high %v2105, 0
        %v2114 = vcombine.high %v2112, 0
        %v2115 = vpack.c.bf16 %v1984, %v1984
        %v2117 = vunpack.c.l.s4 1983009808
        %v2118 = vunpack.c.0.s8 %v2117
        %v2119 = vlaneseq
        %v2120 = vshrl.u32 %v2119, 7
        %v2121 = vsub.s32 %v2118, %v2120
        %v2122 = vrot.slane %v2115, %v2121
        %v2123 = vpack.c.bf16 %v2076, %v2076
        %v2125 = vunpack.c.l.s4 1983009808
        %v2126 = vunpack.c.0.s8 %v2125
        %v2127 = vlaneseq
        %v2128 = vshrl.u32 %v2127, 7
        %v2129 = vsub.s32 %v2126, %v2128
        %v2130 = vrot.slane %v2123, %v2129
        %v2131 = vcombine.low %v2122, %v2130
        %v2132 = vcombine.high %v2122, %v2130
        %v2134 = vunpack.c.l.s4 1934713408
        %v2135 = vunpack.c.0.s8 %v2134
        %v2136 = vlaneseq
        %v2137 = vshrl.u32 %v2136, 7
        %v2138 = vsub.s32 %v2135, %v2137
        %v2139 = vrot.slane %v2131, %v2138
        %v2141 = vunpack.c.l.s4 1934713408
        %v2142 = vunpack.c.0.s8 %v2141
        %v2143 = vlaneseq
        %v2144 = vshrl.u32 %v2143, 7
        %v2145 = vsub.s32 %v2142, %v2144
        %v2146 = vrot.slane %v2132, %v2145
        %v2147 = vcombine.high %v2139, 0
        %v2148 = vcombine.high %v2146, 0
        %v2151 = vpack.i.b16 %v2139, %v2105
        %v2153 = vshrl.u32 %v2105, 16
        %v2154 = vshrl.u32 %v2139, 16
        %v2155 = vpack.i.b16 %v2154, %v2153
        %v2159 = vpack.i.b16 %v2147, %v2113
        %v2161 = vshrl.u32 %v2113, 16
        %v2162 = vshrl.u32 %v2147, 16
        %v2163 = vpack.i.b16 %v2162, %v2161
        %v2167 = vpack.i.b16 %v2146, %v2112
        %v2169 = vshrl.u32 %v2112, 16
        %v2170 = vshrl.u32 %v2146, 16
        %v2171 = vpack.i.b16 %v2170, %v2169
        %v2175 = vpack.i.b16 %v2148, %v2114
        %v2177 = vshrl.u32 %v2114, 16
        %v2178 = vshrl.u32 %v2148, 16
        %v2179 = vpack.i.b16 %v2178, %v2177
        %v2181 = vcombine.low %v2151, %v2167
        %v2183 = vunpack.c.l.s4 1983009808
        %v2184 = vunpack.c.0.s8 %v2183
        %v2185 = vlaneseq
        %v2186 = vshrl.u32 %v2185, 7
        %v2187 = vsub.s32 %v2184, %v2186
        %v2188 = vrot.slane %v2181, %v2187
        %v2189 = vcombine.low %v2159, %v2175
        %v2191 = vunpack.c.l.s4 1983009808
        %v2192 = vunpack.c.0.s8 %v2191
        %v2193 = vlaneseq
        %v2194 = vshrl.u32 %v2193, 7
        %v2195 = vsub.s32 %v2192, %v2194
        %v2196 = vrot.slane %v2189, %v2195
        %v2197 = vcombine.low %v2188, %v2196
        %v2199 = vunpack.c.l.s4 1934713408
        %v2200 = vunpack.c.0.s8 %v2199
        %v2201 = vlaneseq
        %v2202 = vshrl.u32 %v2201, 7
        %v2203 = vsub.s32 %v2200, %v2202
        %v2204 = vrot.slane %v2197, %v2203
        %v2205 = vcombine.high %v2204, 0
        %v2206 = vcombine.low %v2155, %v2171
        %v2208 = vunpack.c.l.s4 1983009808
        %v2209 = vunpack.c.0.s8 %v2208
        %v2210 = vlaneseq
        %v2211 = vshrl.u32 %v2210, 7
        %v2212 = vsub.s32 %v2209, %v2211
        %v2213 = vrot.slane %v2206, %v2212
        %v2214 = vcombine.low %v2163, %v2179
        %v2216 = vunpack.c.l.s4 1983009808
        %v2217 = vunpack.c.0.s8 %v2216
        %v2218 = vlaneseq
        %v2219 = vshrl.u32 %v2218, 7
        %v2220 = vsub.s32 %v2217, %v2219
        %v2221 = vrot.slane %v2214, %v2220
        %v2222 = vcombine.low %v2213, %v2221
        %v2224 = vunpack.c.l.s4 1934713408
        %v2225 = vunpack.c.0.s8 %v2224
        %v2226 = vlaneseq
        %v2227 = vshrl.u32 %v2226, 7
        %v2228 = vsub.s32 %v2225, %v2227
        %v2229 = vrot.slane %v2222, %v2228
        %v2230 = vcombine.high %v2229, 0
        %v2233 = vpack.i.b16 %v2229, %v2204
        %v2234 = vshrl.u32 %v2204, 16
        %v2235 = vshrl.u32 %v2229, 16
        %v2236 = vpack.i.b16 %v2235, %v2234
        %v2239 = vpack.i.b16 %v2230, %v2205
        %v2240 = vshrl.u32 %v2205, 16
        %v2241 = vshrl.u32 %v2230, 16
        %v2242 = vpack.i.b16 %v2241, %v2240
        %2243 = vrot.lane.b32.xlu0 %v2236, 8
        %v2244 = vpop.permute.xlu0 %2243
        %2245 = vrot.lane.b32.xlu0 %v2239, 16
        %v2246 = vpop.permute.xlu0 %2245
        %2247 = vrot.lane.b32.xlu0 %v2242, 24
        %v2248 = vpop.permute.xlu0 %2247
        %v2251 = vsel %vm1663, %v2233, %v2244
        %vm2252 = vcmask 130048
        %v2254 = vsel %vm2252, %v2251, %v2246
        %vm2255 = vcmask 195584
        %v2257 = vsel %vm2255, %v2254, %v2248
        %vm2259 = vcmask 257024
        %2260 = vst.msk [vmem:[#allocation2] sm:$0xf] %vm2259, %v2257
        %v2261 = vld [vmem:[#allocation2] sm:$0xf]
        %v2263 = vlaneseq
        %v2264 = vshrl.u32 %v2263, 7
        %v2265 = vsub.s32 0, %v2264
        %v2266 = vrot.slane %v955, %v2265
        %v2272 = vunpack.c.l.b16 %v936
        %v2273 = vunpack.c.l.b16 %v937
        %v2274 = vunpack.c.l.b16 %v938
        %v2275 = vunpack.c.l.b16 %v939
        %v2276 = vpack.c.b16 %v2273, %v2272
        %v2277 = vpack.c.b16 %v2275, %v2274
        %v2281 = vsel %vm980, %v2261, 0
        %2283 = vmatprep.subr.bf16.mxu0 0
        %2284 = vmatpush1.bf16.msra.mxu0 %v2276
        %2285 = vmatprep.subr.bf16.mxu0 0
        %2286 = vmatpush1.bf16.msra.mxu0 %v2277
        %2287 = vmatprep.subr.bf16.mxu0 0
        %2288 = vmatpush1.bf16.msra.mxu0 0
        %2289 = vmatprep.subr.bf16.mxu0 0
        %2290 = vmatpush1.bf16.msra.mxu0 0
        %2291 = vmatprep.subr.bf16.mxu0 0
        %2292 = vmatpush1.bf16.msra.mxu0 0
        %2293 = vmatprep.subr.bf16.mxu0 0
        %2294 = vmatpush1.bf16.msra.mxu0 0
        %2295 = vmatprep.subr.bf16.mxu0 0
        %2296 = vmatpush1.bf16.msra.mxu0 0
        %2297 = vmatprep.subr.bf16.mxu0 0
        %2298 = vmatpush1.bf16.msra.mxu0 0
        %2299 = vmatprep.subr.bf16.mxu0 0
        %2300 = vmatpush1.bf16.msra.mxu0 0
        %2301 = vmatprep.subr.bf16.mxu0 0
        %2302 = vmatpush1.bf16.msra.mxu0 0
        %2303 = vmatprep.subr.bf16.mxu0 0
        %2304 = vmatpush1.bf16.msra.mxu0 0
        %2305 = vmatprep.subr.bf16.mxu0 0
        %2306 = vmatpush1.bf16.msra.mxu0 0
        %2307 = vmatprep.subr.bf16.mxu0 0
        %2308 = vmatpush1.bf16.msra.mxu0 0
        %2309 = vmatprep.subr.bf16.mxu0 0
        %2310 = vmatpush1.bf16.msra.mxu0 0
        %2311 = vmatprep.subr.bf16.mxu0 0
        %2312 = vmatpush1.bf16.msra.mxu0 0
        %2313 = vmatprep.subr.bf16.mxu0 0
        %2314 = vmatpush1.bf16.msra.mxu0 0
        %2315 = vmatprep.mubr.bf16.mxu0 0
        %2316 = vmatmul.mubr.bf16.gmra.mrb[0].mxu0 %v2281
        %v2317 = vpop.f32.mrb[0].mxu0
        %v2318 = vadd.f32 %v2266, %v2317
        %v2319 = vpop.f32.mrb[0].mxu0
        %v2320 = vpop.f32.mrb[0].mxu0
        %v2321 = vpop.f32.mrb[0].mxu0
        %2322 = vdwg.mxu0
        %v2323 = vadd.f32 %v2318, %v922
        %v2324 = vsel %vm980, %v2323, 0.0
        %2325 = vadd.xlane.f32.xlu0 %v2324
        %v2326 = vpop.xlane.xlu0 %2325
        %v2327 = vrcp.pop 32.0
        %v2328 = vmul.f32 %v2326, %v2327
        %v2329 = vsub.f32 %v2323, %v2328
        %v2330 = vmul.f32 %v2329, %v2329
        %v2331 = vsel %vm980, %v2330, 0.0
        %2332 = vadd.xlane.f32.xlu0 %v2331
        %v2333 = vpop.xlane.xlu0 %2332
        %v2334 = vmul.f32 %v2333, %v2327
        %v2335 = vadd.f32 %v2334, 1e-05
        %v2336 = vrsqrt.pop %v2335
        %v2337 = vmul.f32 %v2329, %v2336
        %v2339 = vlaneseq
        %v2340 = vshrl.u32 %v2339, 7
        %v2341 = vsub.s32 0, %v2340
        %v2342 = vrot.slane %v958, %v2341
        %v2344 = vmul.f32 %v2337, %v2342
        %v2346 = vlaneseq
        %v2347 = vshrl.u32 %v2346, 7
        %v2348 = vsub.s32 0, %v2347
        %v2349 = vrot.slane %v959, %v2348
        %v2351 = vadd.f32 %v2344, %v2349
        %v2352 = vpack.c.bf16 %v2351, %v2351
        %v2354 = vlaneseq
        %v2355 = vshrl.u32 %v2354, 7
        %v2356 = vsub.s32 0, %v2355
        %v2357 = vrot.slane %v956, %v2356
        %v2363 = vunpack.c.l.b16 %v940
        %v2364 = vunpack.c.l.b16 %v941
        %v2365 = vunpack.c.l.b16 %v942
        %v2366 = vunpack.c.l.b16 %v943
        %v2367 = vpack.c.b16 %v2364, %v2363
        %v2368 = vpack.c.b16 %v2366, %v2365
        %v2372 = vsel %vm980, %v2352, 0
        %2374 = vmatprep.subr.bf16.mxu0 0
        %2375 = vmatpush1.bf16.msra.mxu0 %v2367
        %2376 = vmatprep.subr.bf16.mxu0 0
        %2377 = vmatpush1.bf16.msra.mxu0 %v2368
        %2378 = vmatprep.subr.bf16.mxu0 0
        %2379 = vmatpush1.bf16.msra.mxu0 0
        %2380 = vmatprep.subr.bf16.mxu0 0
        %2381 = vmatpush1.bf16.msra.mxu0 0
        %2382 = vmatprep.subr.bf16.mxu0 0
        %2383 = vmatpush1.bf16.msra.mxu0 0
        %2384 = vmatprep.subr.bf16.mxu0 0
        %2385 = vmatpush1.bf16.msra.mxu0 0
        %2386 = vmatprep.subr.bf16.mxu0 0
        %2387 = vmatpush1.bf16.msra.mxu0 0
        %2388 = vmatprep.subr.bf16.mxu0 0
        %2389 = vmatpush1.bf16.msra.mxu0 0
        %2390 = vmatprep.subr.bf16.mxu0 0
        %2391 = vmatpush1.bf16.msra.mxu0 0
        %2392 = vmatprep.subr.bf16.mxu0 0
        %2393 = vmatpush1.bf16.msra.mxu0 0
        %2394 = vmatprep.subr.bf16.mxu0 0
        %2395 = vmatpush1.bf16.msra.mxu0 0
        %2396 = vmatprep.subr.bf16.mxu0 0
        %2397 = vmatpush1.bf16.msra.mxu0 0
        %2398 = vmatprep.subr.bf16.mxu0 0
        %2399 = vmatpush1.bf16.msra.mxu0 0
        %2400 = vmatprep.subr.bf16.mxu0 0
        %2401 = vmatpush1.bf16.msra.mxu0 0
        %2402 = vmatprep.subr.bf16.mxu0 0
        %2403 = vmatpush1.bf16.msra.mxu0 0
        %2404 = vmatprep.subr.bf16.mxu0 0
        %2405 = vmatpush1.bf16.msra.mxu0 0
        %2406 = vmatprep.mubr.bf16.mxu0 0
        %2407 = vmatmul.mubr.bf16.gmra.mrb[0].mxu0 %v2372
        %v2408 = vpop.f32.mrb[0].mxu0
        %v2409 = vadd.f32 %v2357, %v2408
        %v2410 = vpop.f32.mrb[0].mxu0
        %v2411 = vpop.f32.mrb[0].mxu0
        %v2412 = vpop.f32.mrb[0].mxu0
        %2413 = vdwg.mxu0
        %v2414 = vmax.f32 %v2409, 0.0
        %v2415 = vpack.c.bf16 %v2414, %v2414
        %v2417 = vlaneseq
        %v2418 = vshrl.u32 %v2417, 7
        %v2419 = vsub.s32 0, %v2418
        %v2420 = vrot.slane %v957, %v2419
        %v2430 = vunpack.c.l.b16 %v944
        %v2431 = vunpack.c.l.b16 %v945
        %v2432 = vunpack.c.l.b16 %v946
        %v2433 = vunpack.c.l.b16 %v947
        %v2434 = vunpack.c.l.b16 %v948
        %v2435 = vunpack.c.l.b16 %v949
        %v2436 = vunpack.c.l.b16 %v950
        %v2437 = vunpack.c.l.b16 %v951
        %v2438 = vpack.c.b16 %v2431, %v2430
        %v2439 = vpack.c.b16 %v2433, %v2432
        %v2440 = vpack.c.b16 %v2435, %v2434
        %v2441 = vpack.c.b16 %v2437, %v2436
        %vm2446 = vcmask 523264
        %v2448 = vsel %vm2446, %v2415, 0
        %2450 = vmatprep.subr.bf16.mxu0 0
        %2451 = vmatpush1.bf16.msra.mxu0 %v2438
        %2452 = vmatprep.subr.bf16.mxu0 0
        %2453 = vmatpush1.bf16.msra.mxu0 %v2439
        %2454 = vmatprep.subr.bf16.mxu0 0
        %2455 = vmatpush1.bf16.msra.mxu0 %v2440
        %2456 = vmatprep.subr.bf16.mxu0 0
        %2457 = vmatpush1.bf16.msra.mxu0 %v2441
        %2458 = vmatprep.subr.bf16.mxu0 0
        %2459 = vmatpush1.bf16.msra.mxu0 0
        %2460 = vmatprep.subr.bf16.mxu0 0
        %2461 = vmatpush1.bf16.msra.mxu0 0
        %2462 = vmatprep.subr.bf16.mxu0 0
        %2463 = vmatpush1.bf16.msra.mxu0 0
        %2464 = vmatprep.subr.bf16.mxu0 0
        %2465 = vmatpush1.bf16.msra.mxu0 0
        %2466 = vmatprep.subr.bf16.mxu0 0
        %2467 = vmatpush1.bf16.msra.mxu0 0
        %2468 = vmatprep.subr.bf16.mxu0 0
        %2469 = vmatpush1.bf16.msra.mxu0 0
        %2470 = vmatprep.subr.bf16.mxu0 0
        %2471 = vmatpush1.bf16.msra.mxu0 0
        %2472 = vmatprep.subr.bf16.mxu0 0
        %2473 = vmatpush1.bf16.msra.mxu0 0
        %2474 = vmatprep.subr.bf16.mxu0 0
        %2475 = vmatpush1.bf16.msra.mxu0 0
        %2476 = vmatprep.subr.bf16.mxu0 0
        %2477 = vmatpush1.bf16.msra.mxu0 0
        %2478 = vmatprep.subr.bf16.mxu0 0
        %2479 = vmatpush1.bf16.msra.mxu0 0
        %2480 = vmatprep.subr.bf16.mxu0 0
        %2481 = vmatpush1.bf16.msra.mxu0 0
        %2482 = vmatprep.mubr.bf16.mxu0 0
        %2483 = vmatmul.mubr.bf16.gmra.mrb[0].mxu0 %v2448
        %v2484 = vpop.f32.mrb[0].mxu0
        %v2485 = vadd.f32 %v2420, %v2484
        %v2486 = vpop.f32.mrb[0].mxu0
        %v2487 = vpop.f32.mrb[0].mxu0
        %v2488 = vpop.f32.mrb[0].mxu0
        %2489 = vdwg.mxu0
        %v2490 = vadd.f32 %v2485, %v2351
        %v2491 = vsel %vm980, %v2490, 0.0
        %2492 = vadd.xlane.f32.xlu0 %v2491
        %v2493 = vpop.xlane.xlu0 %2492
        %v2494 = vmul.f32 %v2493, %v2327
        %v2495 = vsub.f32 %v2490, %v2494
        %v2496 = vmul.f32 %v2495, %v2495
        %v2497 = vsel %vm980, %v2496, 0.0
        %2498 = vadd.xlane.f32.xlu0 %v2497
        %v2499 = vpop.xlane.xlu0 %2498
        %v2500 = vmul.f32 %v2499, %v2327
        %v2501 = vadd.f32 %v2500, 1e-05
        %v2502 = vrsqrt.pop %v2501
        %v2503 = vmul.f32 %v2495, %v2502
        %v2505 = vlaneseq
        %v2506 = vshrl.u32 %v2505, 7
        %v2507 = vsub.s32 0, %v2506
        %v2508 = vrot.slane %v960, %v2507
        %v2510 = vmul.f32 %v2503, %v2508
        %v2512 = vlaneseq
        %v2513 = vshrl.u32 %v2512, 7
        %v2514 = vsub.s32 0, %v2513
        %v2515 = vrot.slane %v961, %v2514
        %v2517 = vadd.f32 %v2510, %v2515
        %2518 = vst.msk [vmem:[%s860] sm:$0xff] %vm980, %v2517
        %s2519 = sand.u32 %s526, 1
        %s2520 = scalar_lea.sflag [#allocation5], %s2519
        %s2521 = sand.u32 %s526, 1
        %s2522 = smul.addr %s2521, 8
        %s2523 = scalar_lea.vmem [#allocation9], %s2522
        // Predicated region
        $region109: #{tpu_custom_call.1} parent=91 // pred_check
          %p2524 = pneg %p536
        $region110: #{tpu_custom_call.1} parent=91 // pred_check_branch
          %2526 = sbr.rel (%p2524) target = $region112
        $region111: #{tpu_custom_call.1} parent=91 // pred_region
          %s2528 = ssub.s32 128, 128
          %2529 = vsyncadd %s2520, %s2528
          %s2530 = smul.addr %s42, 128
          %s2531 = scalar_lea.hbm %s18, %s2530
          %s2533 = sshll.u32 %s2523, 4
          %s2534 = int_to_ptr.vmem [resolvable:$true] %s2533
          %2536 = dma.vmem_to_hbm [thread:$0]  %s2534, 128, %s2531, %s2520
        $region112: #{tpu_custom_call.1} parent=91 // pred_fallthru
          _
      $region92: #{tpu_custom_call.1} parent=5 // pred_fallthru
        _
      %p2537 = scmp.le.s32.totalorder 2, %s33
      // Predicated region
      $region113: #{tpu_custom_call.1} parent=5 // pred_check
        %p2538 = pneg %p2537
      $region114: #{tpu_custom_call.1} parent=5 // pred_check_branch
        %2540 = sbr.rel (%p2538) target = $region116
      $region115: #{tpu_custom_call.1} parent=5 // pred_region
        %s2541 = ssub.s32 %s33, 2
        // Predicated region
        $region117: #{tpu_custom_call.1} parent=115 // pred_check
          %p2542 = pneg %p542
        $region118: #{tpu_custom_call.1} parent=115 // pred_check_branch
          %2544 = sbr.rel (%p2542) target = $region120
        $region119: #{tpu_custom_call.1} parent=115 // pred_region
          %s2545 = sand.u32 %s527, 1
          %s2546 = scalar_lea.sflag [#allocation5], %s2545
          %s2547 = sand.u32 %s527, 1
          %s2548 = smul.addr %s2547, 8
          %s2549 = scalar_lea.vmem [#allocation9], %s2548
          %2550 = dma.done %s2546, 128
        $region120: #{tpu_custom_call.1} parent=115 // pred_fallthru
          _
      $region116: #{tpu_custom_call.1} parent=5 // pred_fallthru
        _
    $region6: #{tpu_custom_call.1} parent=1 // loop_footer
      %s37 = sadd.s32 1, %s33
    $region7: #{tpu_custom_call.1} parent=1 // loop_footer_branch
      %32 = sbr.rel target = $region3
    $region8: #{tpu_custom_call.1} parent=1 // loop_exit
      _
    %2551 = vsyncpa [#allocation4], 1
    %s2552 = scalar_lea.sflag [#allocation4], 1
    %2553 = vsyncpa %s2552, 1
    %2554 = vsyncpa [#allocation7], 1
    %s2555 = scalar_lea.sflag [#allocation7], 1
    %2556 = vsyncpa %s2555, 1
    %2557 = vsyncpa [#allocation5], 1
    %s2558 = scalar_lea.sflag [#allocation5], 1
    %2559 = vsyncpa %s2558, 1

</llo_original>
